<compile_context>
chip_gen: v6e
topology: v6e:2x2x1
jax: 0.10.0
libtpu: 0.0.40
codegen_flags: <defaults>
</compile_context>

<pallas_src>
import jax
import jax.numpy as jnp
from jax.experimental import pallas as pl
from jax.experimental.pallas import tpu as pltpu

IN_CHAN = 32   # dim / channels C
SIZE    = 8    # spatial size -> N = SIZE*SIZE = 64 tokens
HEADS   = 8    # heads; dim_head=True  =>  inner_dim = HEADS, per-head dim = 1
L_MEM   = 8    # number of memory tokens in m
BATCH   = 2
LN_EPS  = 1e-5

N_TOK   = SIZE * SIZE


def _gelu_tanh(x):
    # TODO(synk): PyTorch nn.GELU() defaults to the exact erf form; Mosaic has no
    # guaranteed erf lowering, so the tanh approximation is used in-kernel (and in
    # the reference) -- the divergence is ~1e-3-level worst case on hidden units.
    return 0.5 * x * (1.0 + jnp.tanh(0.7978845608028654 * (x + 0.044715 * x * x * x)))


def _mean_over_channels(t, ones_lhs):
    # channels-major (C, X) -> (1, X) channel mean via a tiny MXU matmul; the LHS
    # has 8 rows (native sublane granule) and row 0 is used.
    return jnp.dot(ones_lhs, t, preferred_element_type=jnp.float32)[0:1, :]


def _layernorm_cm(t, w_col, b_col, ones_lhs):
    # LayerNorm over the channel (sublane) axis in channels-major layout.
    mu  = _mean_over_channels(t, ones_lhs)          # (1, X)
    ex2 = _mean_over_channels(t * t, ones_lhs)      # (1, X)
    var = ex2 - mu * mu
    inv = jax.lax.rsqrt(var + LN_EPS)               # EUP
    return (t - mu) * inv * w_col + b_col           # (1,X) sublane-bcast, (C,1) lane-bcast


def token_decoder_kernel(x_ref, m_ref, w_in_ref, wo_ref, w2_ref, consts_ref,
                         sel_ref, out_ref):
    C, BN = x_ref.shape            # (32, 128): channels x (batch * tokens)
    H, L, B = HEADS, L_MEM, BATCH

    # ---- unpack the packed parameter slabs (static, 8-aligned sublane slices) ----
    w_in = w_in_ref[...]                    # (3H + 2C, C), pre-transposed weights
    wqT  = w_in[0:H, :]                     # (H, C)   Wq^T with softmax scale folded
    wkvT = w_in[H:3 * H, :]                 # (2H, C)  [Wk^T ; Wv^T]
    w1T  = w_in[3 * H:, :]                  # (2C, C)
    woT  = wo_ref[...]                      # (C, H)
    w2T  = w2_ref[...]                      # (C, 2C)

    consts = consts_ref[...]                # (3C, 128)
    pos    = consts[0:C, :]                 # (C, B*N) pos embedding, pre-tiled over batch
    ln1_w  = consts[C:2 * C, 0:1]           # per-channel vectors as (C, 1) columns
    ln1_b  = consts[C:2 * C, 1:2]
    bo     = consts[C:2 * C, 2:3]
    ln2_w  = consts[C:2 * C, 3:4]
    ln2_b  = consts[C:2 * C, 4:5]
    b2     = consts[C:2 * C, 5:6]
    b1     = consts[C:3 * C, 6:7]           # (2C, 1)
    sel    = sel_ref[...]                   # (B*L, L*B*N) 0/1 k/v lane-expansion selector

    ones_lhs = jnp.full((8, C), 1.0 / C, jnp.float32)   # channel-mean LHS (MXU)

    # ---- tokens, channels-major: 128 lanes = batch * tokens ----
    x = x_ref[...] + pos                                 # (C, B*N)
    m = m_ref[...]                                       # (C, B*L)

    # ---- cross attention (PreNorm2: one shared LayerNorm for x and m) ----
    xn = _layernorm_cm(x, ln1_w, ln1_b, ones_lhs)
    mn = _layernorm_cm(m, ln1_w, ln1_b, ones_lhs)

    q  = jnp.dot(wqT,  xn, preferred_element_type=jnp.float32)   # (H, B*N), scale folded
    kv = jnp.dot(wkvT, mn, preferred_element_type=jnp.float32)   # (2H, B*L) fused k|v

    # Expand per-batch k/v memory columns to the 128 query lanes of their batch with
    # ONE matmul against the packed 0/1 selector (replaces the broadcast+concatenate
    # lane_block construction).  Per-slot slabs are 128-lane-tile-aligned slices.
    kv_exp = jnp.dot(kv, sel, preferred_element_type=jnp.float32)  # (2H, L*B*N)

    # dim_head == 1 -> logits[h, t, l] = q[h, t] * k[h, batch(t)*L + l]; the softmax
    # over L is a short unrolled elementwise max/add chain over L full (H,128) vregs.
    k_l = [kv_exp[0:H,     l * BN:(l + 1) * BN] for l in range(L)]
    v_l = [kv_exp[H:2 * H, l * BN:(l + 1) * BN] for l in range(L)]
    logits = [q * k_l[l] for l in range(L)]
    mx = logits[0]
    for t in logits[1:]:
        mx = jnp.maximum(mx, t)
    es = [jnp.exp(t - mx) for t in logits]
    den = es[0]
    for e in es[1:]:
        den = den + e
    num = es[0] * v_l[0]
    for l in range(1, L):
        num = num + es[l] * v_l[l]
    av = num * pl.reciprocal(den, approx=True)                    # (H, B*N)

    attn_out = jnp.dot(woT, av, preferred_element_type=jnp.float32) + bo
    x = x + attn_out                                              # Residual2

    # ---- feed-forward (PreNorm + Residual) ----
    xn2 = _layernorm_cm(x, ln2_w, ln2_b, ones_lhs)
    hid = jnp.dot(w1T, xn2, preferred_element_type=jnp.float32) + b1   # (2C, B*N)
    hid = _gelu_tanh(hid)
    ff  = jnp.dot(w2T, hid, preferred_element_type=jnp.float32) + b2   # (C, B*N)

    out_ref[...] = x + ff                                         # lane-dense (C,128) store


def token_decoder_forward(x_nchw, m, packed):
    B, C, Hs, Ws = x_nchw.shape
    N = Hs * Ws
    L = m.shape[1]
    BN = B * N

    # channels-major, lane-dense token slabs (tiny layout plumbing in the wrapper):
    #   x: (C, B*N) = (32, 128),   m: (C, B*L) = (32, 16)
    x_cbn = jnp.transpose(x_nchw.reshape(B, C, N), (1, 0, 2)).reshape(C, BN)
    m_cbl = jnp.transpose(m, (2, 0, 1)).reshape(C, B * L)

    w_in, wo_T, w2_T = packed["w_in"], packed["wo_T"], packed["w2_T"]
    consts, sel = packed["consts"], packed["sel"]

    def full_spec(shape):
        zeros = (0,) * len(shape)
        return pl.BlockSpec(tuple(shape), lambda i, _z=zeros: _z)

    grid_spec = pltpu.PrefetchScalarGridSpec(
        num_scalar_prefetch=0,
        grid=(1,),                                  # batch folded into the 128 lanes
        in_specs=[
            full_spec(x_cbn.shape),                 # (C, B*N)  lane-dense input slab
            full_spec(m_cbl.shape),                 # (C, B*L)
            full_spec(w_in.shape),                  # [Wq*scale ; Wk ; Wv ; W1]^T
            full_spec(wo_T.shape),                  # Wo^T
            full_spec(w2_T.shape),                  # W2^T
            full_spec(consts.shape),                # [pos(tiled) ; LN / bias columns]
            full_spec(sel.shape),                   # k/v lane-expansion selector
        ],
        out_specs=full_spec((C, BN)),               # lane-dense (C, 128) output slab
    )

    out_cbn = pl.pallas_call(
        token_decoder_kernel,
        out_shape=jax.ShapeDtypeStruct((C, BN), jnp.float32),
        grid_spec=grid_spec,
        # grid=(1,): deliberately NOT split across v7x's two TensorCores at this
        # size (per-TC work would be half-masked 64-lane vregs + per-step overhead);
        # "parallel" buys nothing on single-TC v5e/v6e either.
        compiler_params=pltpu.CompilerParams(dimension_semantics=("arbitrary",)),
    )(x_cbn, m_cbl, w_in, wo_T, w2_T, consts, sel)

    # (C, B*N) -> (B, C, H, W): free row-major reshapes + one tiny wrapper transpose
    return jnp.transpose(out_cbn.reshape(C, B, N), (1, 0, 2)).reshape(B, C, Hs, Ws)


def init_params(key):
    C, Hd = IN_CHAN, HEADS
    ks = jax.random.split(key, 8)
    f32 = jnp.float32
    return dict(
        pos=jax.random.normal(ks[0], (1, C, SIZE, SIZE), f32),          # torch.randn
        ln1_w=jnp.ones((1, C), f32), ln1_b=jnp.zeros((1, C), f32),      # nn.LayerNorm init
        wq=0.1 * jax.random.normal(ks[1], (C, Hd), f32),
        wk=0.1 * jax.random.normal(ks[2], (C, Hd), f32),
        wv=0.1 * jax.random.normal(ks[3], (C, Hd), f32),
        wo=0.1 * jax.random.normal(ks[4], (Hd, C), f32),
        bo=jnp.zeros((1, C), f32),
        ln2_w=jnp.ones((1, C), f32), ln2_b=jnp.zeros((1, C), f32),
        w1=0.1 * jax.random.normal(ks[5], (C, 2 * C), f32),
        b1=jnp.zeros((1, 2 * C), f32),
        w2=0.1 * jax.random.normal(ks[6], (2 * C, C), f32),
        b2=jnp.zeros((1, C), f32),
    )


def pack_params(params):
    """One-time init transform: transpose weights for channels-major W^T @ X
    matmuls, fold the softmax scale into Wq, pre-tile the positional embedding
    over batch, pack LN/bias vectors as (C, 1) columns, and build the 0/1
    selector that expands per-batch k/v memory columns to the 128 query lanes."""
    C, H, L, B, N = IN_CHAN, HEADS, L_MEM, BATCH, N_TOK
    BN = B * N
    scale = float(C) ** -0.5

    w_in = jnp.concatenate(
        [(params["wq"] * scale).T, params["wk"].T, params["wv"].T, params["w1"].T],
        axis=0).astype(jnp.float32)                              # (3H + 2C, C) = (88, 32)
    wo_T = params["wo"].T.astype(jnp.float32)                    # (C, H)  = (32, 8)
    w2_T = params["w2"].T.astype(jnp.float32)                    # (C, 2C) = (32, 64)

    pos_tiled = jnp.tile(params["pos"].reshape(C, N), (1, B))    # (C, B*N) = (32, 128)

    vec_block = jnp.zeros((2 * C, BN), jnp.float32)
    cols = [params["ln1_w"], params["ln1_b"], params["bo"],
            params["ln2_w"], params["ln2_b"], params["b2"], params["b1"]]
    for j, v in enumerate(cols):
        v = v.reshape(-1)
        vec_block = vec_block.at[:v.shape[0], j].set(v)
    consts = jnp.concatenate([pos_tiled, vec_block], axis=0)     # (3C, 128) = (96, 128)

    # selector: sel[j, l*B*N + t] = 1  iff memory column j == batch(t)*L + l
    col = jnp.arange(L * BN)
    l_of = col // BN
    b_of = (col % BN) // N
    sel = (jnp.arange(B * L)[:, None] == (b_of * L + l_of)[None, :]).astype(jnp.float32)

    return dict(w_in=w_in, wo_T=wo_T, w2_T=w2_T, consts=consts, sel=sel)


def reference(x_nchw, m, params):
    """Pure-JAX replica of the PyTorch forward for correctness checking."""
    B, C, H, W = x_nchw.shape
    x = x_nchw + params["pos"]
    x = jnp.transpose(x, (0, 2, 3, 1)).reshape(B, H * W, C)

    def ln(t, w, b):
        mu = t.mean(-1, keepdims=True)
        var = ((t - mu) ** 2).mean(-1, keepdims=True)
        return (t - mu) * jax.lax.rsqrt(var + LN_EPS) * w + b

    xn = ln(x, params["ln1_w"][0], params["ln1_b"][0])
    mn = ln(m, params["ln1_w"][0], params["ln1_b"][0])
    q = xn @ params["wq"]; k = mn @ params["wk"]; v = mn @ params["wv"]
    dots = jnp.einsum("bih,bjh->bhij", q, k) * (C ** -0.5)   # d_head = 1
    attn = jax.nn.softmax(dots, axis=-1)
    av = jnp.einsum("bhij,bjh->bih", attn, v)
    x = x + av @ params["wo"] + params["bo"][0]
    xn2 = ln(x, params["ln2_w"][0], params["ln2_b"][0])
    hid = _gelu_tanh(xn2 @ params["w1"] + params["b1"][0])
    x = x + hid @ params["w2"] + params["b2"][0]
    return jnp.transpose(x.reshape(B, H, W, C), (0, 3, 1, 2))


if __name__ == "__main__":
    key = jax.random.PRNGKey(0)
    kx, km, kp = jax.random.split(key, 3)
    x = jax.random.normal(kx, (BATCH, IN_CHAN, SIZE, SIZE), jnp.float32)
    m = jax.random.normal(km, (BATCH, L_MEM, IN_CHAN), jnp.float32)
    params = init_params(kp)
    packed = pack_params(params)          # one-time packing, not per forward

    out = jax.jit(token_decoder_forward)(x, m, packed)
    out = jax.block_until_ready(out)

    ref = reference(x, m, params)
    assert out.shape == x.shape
    assert jnp.allclose(out, ref, atol=1e-3, rtol=1e-3)
    print("KERNEL_OK")
</pallas_src>

<mosaic_0001>
module attributes {stable_mosaic.version = 11 : i64} {
  func.func @token_decoder_kernel(%arg0: i32, %arg1: memref<32x128xf32, #tpu.memory_space<vmem>>, %arg2: memref<32x16xf32, #tpu.memory_space<vmem>>, %arg3: memref<88x32xf32, #tpu.memory_space<vmem>>, %arg4: memref<32x8xf32, #tpu.memory_space<vmem>>, %arg5: memref<32x64xf32, #tpu.memory_space<vmem>>, %arg6: memref<96x128xf32, #tpu.memory_space<vmem>>, %arg7: memref<16x1024xf32, #tpu.memory_space<vmem>>, %arg8: memref<32x128xf32, #tpu.memory_space<vmem>>) attributes {dimension_semantics = [#tpu.dimension_semantics<arbitrary>], iteration_bounds = array<i64: 1>, scalar_prefetch = 0 : i64, scratch_operands = 0 : i64, tpu.core_type = #tpu.core_type<tc>, window_params = [{pipeline_mode = #tpu.pipeline_mode<synchronous>, transform_indices = @transform_0, window_bounds = array<i64: 32, 128>}, {pipeline_mode = #tpu.pipeline_mode<synchronous>, transform_indices = @transform_1, window_bounds = array<i64: 32, 16>}, {pipeline_mode = #tpu.pipeline_mode<synchronous>, transform_indices = @transform_2, window_bounds = array<i64: 88, 32>}, {pipeline_mode = #tpu.pipeline_mode<synchronous>, transform_indices = @transform_3, window_bounds = array<i64: 32, 8>}, {pipeline_mode = #tpu.pipeline_mode<synchronous>, transform_indices = @transform_4, window_bounds = array<i64: 32, 64>}, {pipeline_mode = #tpu.pipeline_mode<synchronous>, transform_indices = @transform_5, window_bounds = array<i64: 96, 128>}, {pipeline_mode = #tpu.pipeline_mode<synchronous>, transform_indices = @transform_6, window_bounds = array<i64: 16, 1024>}, {pipeline_mode = #tpu.pipeline_mode<synchronous>, transform_indices = @transform_7, window_bounds = array<i64: 32, 128>}]} {
    %c0 = arith.constant 0 : index
    %c0_0 = arith.constant 0 : index
    %0 = vector.load %arg3[%c0, %c0_0] : memref<88x32xf32, #tpu.memory_space<vmem>>, vector<88x32xf32>
    %1 = vector.extract_strided_slice %0 {offsets = [0, 0], sizes = [8, 32], strides = [1, 1]} : vector<88x32xf32> to vector<8x32xf32>
    %2 = vector.extract_strided_slice %0 {offsets = [8, 0], sizes = [16, 32], strides = [1, 1]} : vector<88x32xf32> to vector<16x32xf32>
    %3 = vector.extract_strided_slice %0 {offsets = [24, 0], sizes = [64, 32], strides = [1, 1]} : vector<88x32xf32> to vector<64x32xf32>
    %c0_1 = arith.constant 0 : index
    %c0_2 = arith.constant 0 : index
    %4 = vector.load %arg4[%c0_1, %c0_2] : memref<32x8xf32, #tpu.memory_space<vmem>>, vector<32x8xf32>
    %c0_3 = arith.constant 0 : index
    %c0_4 = arith.constant 0 : index
    %5 = vector.load %arg5[%c0_3, %c0_4] : memref<32x64xf32, #tpu.memory_space<vmem>>, vector<32x64xf32>
    %c0_5 = arith.constant 0 : index
    %c0_6 = arith.constant 0 : index
    %6 = vector.load %arg6[%c0_5, %c0_6] : memref<96x128xf32, #tpu.memory_space<vmem>>, vector<96x128xf32>
    %7 = vector.extract_strided_slice %6 {offsets = [0, 0], sizes = [32, 128], strides = [1, 1]} : vector<96x128xf32> to vector<32x128xf32>
    %8 = vector.extract_strided_slice %6 {offsets = [32, 0], sizes = [32, 1], strides = [1, 1]} : vector<96x128xf32> to vector<32x1xf32>
    %9 = vector.extract_strided_slice %6 {offsets = [32, 1], sizes = [32, 1], strides = [1, 1]} : vector<96x128xf32> to vector<32x1xf32>
    %10 = vector.extract_strided_slice %6 {offsets = [32, 2], sizes = [32, 1], strides = [1, 1]} : vector<96x128xf32> to vector<32x1xf32>
    %11 = vector.extract_strided_slice %6 {offsets = [32, 3], sizes = [32, 1], strides = [1, 1]} : vector<96x128xf32> to vector<32x1xf32>
    %12 = vector.extract_strided_slice %6 {offsets = [32, 4], sizes = [32, 1], strides = [1, 1]} : vector<96x128xf32> to vector<32x1xf32>
    %13 = vector.extract_strided_slice %6 {offsets = [32, 5], sizes = [32, 1], strides = [1, 1]} : vector<96x128xf32> to vector<32x1xf32>
    %14 = vector.extract_strided_slice %6 {offsets = [32, 6], sizes = [64, 1], strides = [1, 1]} : vector<96x128xf32> to vector<64x1xf32>
    %c0_7 = arith.constant 0 : index
    %c0_8 = arith.constant 0 : index
    %15 = vector.load %arg7[%c0_7, %c0_8] : memref<16x1024xf32, #tpu.memory_space<vmem>>, vector<16x1024xf32>
    %cst = arith.constant 3.125000e-02 : f32
    %16 = vector.broadcast %cst : f32 to vector<8x32xf32>
    %c0_9 = arith.constant 0 : index
    %c0_10 = arith.constant 0 : index
    %17 = vector.load %arg1[%c0_9, %c0_10] : memref<32x128xf32, #tpu.memory_space<vmem>>, vector<32x128xf32>
    %18 = arith.addf %17, %7 : vector<32x128xf32>
    %c0_11 = arith.constant 0 : index
    %c0_12 = arith.constant 0 : index
    %19 = vector.load %arg2[%c0_11, %c0_12] : memref<32x16xf32, #tpu.memory_space<vmem>>, vector<32x16xf32>
    %cst_13 = arith.constant dense<0.000000e+00> : vector<8x128xf32>
    %20 = tpu.matmul %16, %18, %cst_13 {dimension_numbers = #tpu.dot_dimension_numbers<[1], [0], [0], [1], [0, 0, 1, 1], [], []>} : vector<8x32xf32>, vector<32x128xf32>, vector<8x128xf32> -> vector<8x128xf32>
    %21 = vector.extract_strided_slice %20 {offsets = [0, 0], sizes = [1, 128], strides = [1, 1]} : vector<8x128xf32> to vector<1x128xf32>
    %22 = arith.mulf %18, %18 : vector<32x128xf32>
    %cst_14 = arith.constant dense<0.000000e+00> : vector<8x128xf32>
    %23 = tpu.matmul %16, %22, %cst_14 {dimension_numbers = #tpu.dot_dimension_numbers<[1], [0], [0], [1], [0, 0, 1, 1], [], []>} : vector<8x32xf32>, vector<32x128xf32>, vector<8x128xf32> -> vector<8x128xf32>
    %24 = vector.extract_strided_slice %23 {offsets = [0, 0], sizes = [1, 128], strides = [1, 1]} : vector<8x128xf32> to vector<1x128xf32>
    %25 = arith.mulf %21, %21 : vector<1x128xf32>
    %26 = arith.subf %24, %25 : vector<1x128xf32>
    %cst_15 = arith.constant 9.99999974E-6 : f32
    %27 = vector.broadcast %cst_15 : f32 to vector<1x128xf32>
    %28 = arith.addf %26, %27 : vector<1x128xf32>
    %29 = math.rsqrt %28 : vector<1x128xf32>
    %30 = vector.broadcast %21 : vector<1x128xf32> to vector<32x128xf32>
    %31 = arith.subf %18, %30 : vector<32x128xf32>
    %32 = vector.broadcast %29 : vector<1x128xf32> to vector<32x128xf32>
    %33 = arith.mulf %31, %32 : vector<32x128xf32>
    %34 = vector.broadcast %8 : vector<32x1xf32> to vector<32x128xf32>
    %35 = arith.mulf %33, %34 : vector<32x128xf32>
    %36 = vector.broadcast %9 : vector<32x1xf32> to vector<32x128xf32>
    %37 = arith.addf %35, %36 : vector<32x128xf32>
    %cst_16 = arith.constant dense<0.000000e+00> : vector<8x16xf32>
    %38 = tpu.matmul %16, %19, %cst_16 {dimension_numbers = #tpu.dot_dimension_numbers<[1], [0], [0], [1], [0, 0, 1, 1], [], []>} : vector<8x32xf32>, vector<32x16xf32>, vector<8x16xf32> -> vector<8x16xf32>
    %39 = vector.extract_strided_slice %38 {offsets = [0, 0], sizes = [1, 16], strides = [1, 1]} : vector<8x16xf32> to vector<1x16xf32>
    %40 = arith.mulf %19, %19 : vector<32x16xf32>
    %cst_17 = arith.constant dense<0.000000e+00> : vector<8x16xf32>
    %41 = tpu.matmul %16, %40, %cst_17 {dimension_numbers = #tpu.dot_dimension_numbers<[1], [0], [0], [1], [0, 0, 1, 1], [], []>} : vector<8x32xf32>, vector<32x16xf32>, vector<8x16xf32> -> vector<8x16xf32>
    %42 = vector.extract_strided_slice %41 {offsets = [0, 0], sizes = [1, 16], strides = [1, 1]} : vector<8x16xf32> to vector<1x16xf32>
    %43 = arith.mulf %39, %39 : vector<1x16xf32>
    %44 = arith.subf %42, %43 : vector<1x16xf32>
    %cst_18 = arith.constant 9.99999974E-6 : f32
    %45 = vector.broadcast %cst_18 : f32 to vector<1x16xf32>
    %46 = arith.addf %44, %45 : vector<1x16xf32>
    %47 = math.rsqrt %46 : vector<1x16xf32>
    %48 = vector.broadcast %39 : vector<1x16xf32> to vector<32x16xf32>
    %49 = arith.subf %19, %48 : vector<32x16xf32>
    %50 = vector.broadcast %47 : vector<1x16xf32> to vector<32x16xf32>
    %51 = arith.mulf %49, %50 : vector<32x16xf32>
    %52 = vector.broadcast %8 : vector<32x1xf32> to vector<32x16xf32>
    %53 = arith.mulf %51, %52 : vector<32x16xf32>
    %54 = vector.broadcast %9 : vector<32x1xf32> to vector<32x16xf32>
    %55 = arith.addf %53, %54 : vector<32x16xf32>
    %cst_19 = arith.constant dense<0.000000e+00> : vector<8x128xf32>
    %56 = tpu.matmul %1, %37, %cst_19 {dimension_numbers = #tpu.dot_dimension_numbers<[1], [0], [0], [1], [0, 0, 1, 1], [], []>} : vector<8x32xf32>, vector<32x128xf32>, vector<8x128xf32> -> vector<8x128xf32>
    %cst_20 = arith.constant dense<0.000000e+00> : vector<16x16xf32>
    %57 = tpu.matmul %2, %55, %cst_20 {dimension_numbers = #tpu.dot_dimension_numbers<[1], [0], [0], [1], [0, 0, 1, 1], [], []>} : vector<16x32xf32>, vector<32x16xf32>, vector<16x16xf32> -> vector<16x16xf32>
    %cst_21 = arith.constant dense<0.000000e+00> : vector<16x1024xf32>
    %58 = tpu.matmul %57, %15, %cst_21 {dimension_numbers = #tpu.dot_dimension_numbers<[1], [0], [0], [1], [0, 0, 1, 1], [], []>} : vector<16x16xf32>, vector<16x1024xf32>, vector<16x1024xf32> -> vector<16x1024xf32>
    %59 = vector.extract_strided_slice %58 {offsets = [0, 0], sizes = [8, 128], strides = [1, 1]} : vector<16x1024xf32> to vector<8x128xf32>
    %60 = vector.extract_strided_slice %58 {offsets = [0, 128], sizes = [8, 128], strides = [1, 1]} : vector<16x1024xf32> to vector<8x128xf32>
    %61 = vector.extract_strided_slice %58 {offsets = [0, 256], sizes = [8, 128], strides = [1, 1]} : vector<16x1024xf32> to vector<8x128xf32>
    %62 = vector.extract_strided_slice %58 {offsets = [0, 384], sizes = [8, 128], strides = [1, 1]} : vector<16x1024xf32> to vector<8x128xf32>
    %63 = vector.extract_strided_slice %58 {offsets = [0, 512], sizes = [8, 128], strides = [1, 1]} : vector<16x1024xf32> to vector<8x128xf32>
    %64 = vector.extract_strided_slice %58 {offsets = [0, 640], sizes = [8, 128], strides = [1, 1]} : vector<16x1024xf32> to vector<8x128xf32>
    %65 = vector.extract_strided_slice %58 {offsets = [0, 768], sizes = [8, 128], strides = [1, 1]} : vector<16x1024xf32> to vector<8x128xf32>
    %66 = vector.extract_strided_slice %58 {offsets = [0, 896], sizes = [8, 128], strides = [1, 1]} : vector<16x1024xf32> to vector<8x128xf32>
    %67 = vector.extract_strided_slice %58 {offsets = [8, 0], sizes = [8, 128], strides = [1, 1]} : vector<16x1024xf32> to vector<8x128xf32>
    %68 = vector.extract_strided_slice %58 {offsets = [8, 128], sizes = [8, 128], strides = [1, 1]} : vector<16x1024xf32> to vector<8x128xf32>
    %69 = vector.extract_strided_slice %58 {offsets = [8, 256], sizes = [8, 128], strides = [1, 1]} : vector<16x1024xf32> to vector<8x128xf32>
    %70 = vector.extract_strided_slice %58 {offsets = [8, 384], sizes = [8, 128], strides = [1, 1]} : vector<16x1024xf32> to vector<8x128xf32>
    %71 = vector.extract_strided_slice %58 {offsets = [8, 512], sizes = [8, 128], strides = [1, 1]} : vector<16x1024xf32> to vector<8x128xf32>
    %72 = vector.extract_strided_slice %58 {offsets = [8, 640], sizes = [8, 128], strides = [1, 1]} : vector<16x1024xf32> to vector<8x128xf32>
    %73 = vector.extract_strided_slice %58 {offsets = [8, 768], sizes = [8, 128], strides = [1, 1]} : vector<16x1024xf32> to vector<8x128xf32>
    %74 = vector.extract_strided_slice %58 {offsets = [8, 896], sizes = [8, 128], strides = [1, 1]} : vector<16x1024xf32> to vector<8x128xf32>
    %75 = arith.mulf %56, %59 : vector<8x128xf32>
    %76 = arith.mulf %56, %60 : vector<8x128xf32>
    %77 = arith.mulf %56, %61 : vector<8x128xf32>
    %78 = arith.mulf %56, %62 : vector<8x128xf32>
    %79 = arith.mulf %56, %63 : vector<8x128xf32>
    %80 = arith.mulf %56, %64 : vector<8x128xf32>
    %81 = arith.mulf %56, %65 : vector<8x128xf32>
    %82 = arith.mulf %56, %66 : vector<8x128xf32>
    %83 = arith.maximumf %75, %76 : vector<8x128xf32>
    %84 = arith.maximumf %83, %77 : vector<8x128xf32>
    %85 = arith.maximumf %84, %78 : vector<8x128xf32>
    %86 = arith.maximumf %85, %79 : vector<8x128xf32>
    %87 = arith.maximumf %86, %80 : vector<8x128xf32>
    %88 = arith.maximumf %87, %81 : vector<8x128xf32>
    %89 = arith.maximumf %88, %82 : vector<8x128xf32>
    %90 = arith.subf %75, %89 : vector<8x128xf32>
    %91 = math.exp %90 : vector<8x128xf32>
    %92 = arith.subf %76, %89 : vector<8x128xf32>
    %93 = math.exp %92 : vector<8x128xf32>
    %94 = arith.subf %77, %89 : vector<8x128xf32>
    %95 = math.exp %94 : vector<8x128xf32>
    %96 = arith.subf %78, %89 : vector<8x128xf32>
    %97 = math.exp %96 : vector<8x128xf32>
    %98 = arith.subf %79, %89 : vector<8x128xf32>
    %99 = math.exp %98 : vector<8x128xf32>
    %100 = arith.subf %80, %89 : vector<8x128xf32>
    %101 = math.exp %100 : vector<8x128xf32>
    %102 = arith.subf %81, %89 : vector<8x128xf32>
    %103 = math.exp %102 : vector<8x128xf32>
    %104 = arith.subf %82, %89 : vector<8x128xf32>
    %105 = math.exp %104 : vector<8x128xf32>
    %106 = arith.addf %91, %93 : vector<8x128xf32>
    %107 = arith.addf %106, %95 : vector<8x128xf32>
    %108 = arith.addf %107, %97 : vector<8x128xf32>
    %109 = arith.addf %108, %99 : vector<8x128xf32>
    %110 = arith.addf %109, %101 : vector<8x128xf32>
    %111 = arith.addf %110, %103 : vector<8x128xf32>
    %112 = arith.addf %111, %105 : vector<8x128xf32>
    %113 = arith.mulf %91, %67 : vector<8x128xf32>
    %114 = arith.mulf %93, %68 : vector<8x128xf32>
    %115 = arith.addf %113, %114 : vector<8x128xf32>
    %116 = arith.mulf %95, %69 : vector<8x128xf32>
    %117 = arith.addf %115, %116 : vector<8x128xf32>
    %118 = arith.mulf %97, %70 : vector<8x128xf32>
    %119 = arith.addf %117, %118 : vector<8x128xf32>
    %120 = arith.mulf %99, %71 : vector<8x128xf32>
    %121 = arith.addf %119, %120 : vector<8x128xf32>
    %122 = arith.mulf %101, %72 : vector<8x128xf32>
    %123 = arith.addf %121, %122 : vector<8x128xf32>
    %124 = arith.mulf %103, %73 : vector<8x128xf32>
    %125 = arith.addf %123, %124 : vector<8x128xf32>
    %126 = arith.mulf %105, %74 : vector<8x128xf32>
    %127 = arith.addf %125, %126 : vector<8x128xf32>
    %128 = tpu.reciprocal %112 {approx = true} : vector<8x128xf32> -> vector<8x128xf32>
    %129 = arith.mulf %127, %128 : vector<8x128xf32>
    %cst_22 = arith.constant dense<0.000000e+00> : vector<32x128xf32>
    %130 = tpu.matmul %4, %129, %cst_22 {dimension_numbers = #tpu.dot_dimension_numbers<[1], [0], [0], [1], [0, 0, 1, 1], [], []>} : vector<32x8xf32>, vector<8x128xf32>, vector<32x128xf32> -> vector<32x128xf32>
    %131 = vector.broadcast %10 : vector<32x1xf32> to vector<32x128xf32>
    %132 = arith.addf %130, %131 : vector<32x128xf32>
    %133 = arith.addf %18, %132 : vector<32x128xf32>
    %cst_23 = arith.constant dense<0.000000e+00> : vector<8x128xf32>
    %134 = tpu.matmul %16, %133, %cst_23 {dimension_numbers = #tpu.dot_dimension_numbers<[1], [0], [0], [1], [0, 0, 1, 1], [], []>} : vector<8x32xf32>, vector<32x128xf32>, vector<8x128xf32> -> vector<8x128xf32>
    %135 = vector.extract_strided_slice %134 {offsets = [0, 0], sizes = [1, 128], strides = [1, 1]} : vector<8x128xf32> to vector<1x128xf32>
    %136 = arith.mulf %133, %133 : vector<32x128xf32>
    %cst_24 = arith.constant dense<0.000000e+00> : vector<8x128xf32>
    %137 = tpu.matmul %16, %136, %cst_24 {dimension_numbers = #tpu.dot_dimension_numbers<[1], [0], [0], [1], [0, 0, 1, 1], [], []>} : vector<8x32xf32>, vector<32x128xf32>, vector<8x128xf32> -> vector<8x128xf32>
    %138 = vector.extract_strided_slice %137 {offsets = [0, 0], sizes = [1, 128], strides = [1, 1]} : vector<8x128xf32> to vector<1x128xf32>
    %139 = arith.mulf %135, %135 : vector<1x128xf32>
    %140 = arith.subf %138, %139 : vector<1x128xf32>
    %cst_25 = arith.constant 9.99999974E-6 : f32
    %141 = vector.broadcast %cst_25 : f32 to vector<1x128xf32>
    %142 = arith.addf %140, %141 : vector<1x128xf32>
    %143 = math.rsqrt %142 : vector<1x128xf32>
    %144 = vector.broadcast %135 : vector<1x128xf32> to vector<32x128xf32>
    %145 = arith.subf %133, %144 : vector<32x128xf32>
    %146 = vector.broadcast %143 : vector<1x128xf32> to vector<32x128xf32>
    %147 = arith.mulf %145, %146 : vector<32x128xf32>
    %148 = vector.broadcast %11 : vector<32x1xf32> to vector<32x128xf32>
    %149 = arith.mulf %147, %148 : vector<32x128xf32>
    %150 = vector.broadcast %12 : vector<32x1xf32> to vector<32x128xf32>
    %151 = arith.addf %149, %150 : vector<32x128xf32>
    %cst_26 = arith.constant dense<0.000000e+00> : vector<64x128xf32>
    %152 = tpu.matmul %3, %151, %cst_26 {dimension_numbers = #tpu.dot_dimension_numbers<[1], [0], [0], [1], [0, 0, 1, 1], [], []>} : vector<64x32xf32>, vector<32x128xf32>, vector<64x128xf32> -> vector<64x128xf32>
    %153 = vector.broadcast %14 : vector<64x1xf32> to vector<64x128xf32>
    %154 = arith.addf %152, %153 : vector<64x128xf32>
    %cst_27 = arith.constant 5.000000e-01 : f32
    %155 = vector.broadcast %cst_27 : f32 to vector<64x128xf32>
    %156 = arith.mulf %155, %154 : vector<64x128xf32>
    %cst_28 = arith.constant 4.471500e-02 : f32
    %157 = vector.broadcast %cst_28 : f32 to vector<64x128xf32>
    %158 = arith.mulf %157, %154 : vector<64x128xf32>
    %159 = arith.mulf %158, %154 : vector<64x128xf32>
    %160 = arith.mulf %159, %154 : vector<64x128xf32>
    %161 = arith.addf %154, %160 : vector<64x128xf32>
    %cst_29 = arith.constant 0.797884583 : f32
    %162 = vector.broadcast %cst_29 : f32 to vector<64x128xf32>
    %163 = arith.mulf %162, %161 : vector<64x128xf32>
    %164 = math.tanh %163 : vector<64x128xf32>
    %cst_30 = arith.constant 1.000000e+00 : f32
    %165 = vector.broadcast %cst_30 : f32 to vector<64x128xf32>
    %166 = arith.addf %165, %164 : vector<64x128xf32>
    %167 = arith.mulf %156, %166 : vector<64x128xf32>
    %cst_31 = arith.constant dense<0.000000e+00> : vector<32x128xf32>
    %168 = tpu.matmul %5, %167, %cst_31 {dimension_numbers = #tpu.dot_dimension_numbers<[1], [0], [0], [1], [0, 0, 1, 1], [], []>} : vector<32x64xf32>, vector<64x128xf32>, vector<32x128xf32> -> vector<32x128xf32>
    %169 = vector.broadcast %13 : vector<32x1xf32> to vector<32x128xf32>
    %170 = arith.addf %168, %169 : vector<32x128xf32>
    %171 = arith.addf %133, %170 : vector<32x128xf32>
    %c0_32 = arith.constant 0 : index
    %c0_33 = arith.constant 0 : index
    %172 = vector.load %arg8[%c0_32, %c0_33] : memref<32x128xf32, #tpu.memory_space<vmem>>, vector<32x128xf32>
    tpu.vector_store %arg8[%c0_32, %c0_33], %171 {strides = array<i32>} : memref<32x128xf32, #tpu.memory_space<vmem>>, vector<32x128xf32>,
    return
  }
  func.func @transform_0(%arg0: i32) -> (i32, i32) {
    %c0_i32 = arith.constant 0 : i32
    %c0_i32_0 = arith.constant 0 : i32
    %c0_i32_1 = arith.constant 0 : i32
    return %c0_i32, %c0_i32_0 : i32, i32
  }
  func.func @transform_1(%arg0: i32) -> (i32, i32) {
    %c0_i32 = arith.constant 0 : i32
    %c0_i32_0 = arith.constant 0 : i32
    %c0_i32_1 = arith.constant 0 : i32
    return %c0_i32, %c0_i32_0 : i32, i32
  }
  func.func @transform_2(%arg0: i32) -> (i32, i32) {
    %c0_i32 = arith.constant 0 : i32
    %c0_i32_0 = arith.constant 0 : i32
    %c0_i32_1 = arith.constant 0 : i32
    return %c0_i32, %c0_i32_0 : i32, i32
  }
  func.func @transform_3(%arg0: i32) -> (i32, i32) {
    %c0_i32 = arith.constant 0 : i32
    %c0_i32_0 = arith.constant 0 : i32
    %c0_i32_1 = arith.constant 0 : i32
    return %c0_i32, %c0_i32_0 : i32, i32
  }
  func.func @transform_4(%arg0: i32) -> (i32, i32) {
    %c0_i32 = arith.constant 0 : i32
    %c0_i32_0 = arith.constant 0 : i32
    %c0_i32_1 = arith.constant 0 : i32
    return %c0_i32, %c0_i32_0 : i32, i32
  }
  func.func @transform_5(%arg0: i32) -> (i32, i32) {
    %c0_i32 = arith.constant 0 : i32
    %c0_i32_0 = arith.constant 0 : i32
    %c0_i32_1 = arith.constant 0 : i32
    return %c0_i32, %c0_i32_0 : i32, i32
  }
  func.func @transform_6(%arg0: i32) -> (i32, i32) {
    %c0_i32 = arith.constant 0 : i32
    %c0_i32_0 = arith.constant 0 : i32
    %c0_i32_1 = arith.constant 0 : i32
    return %c0_i32, %c0_i32_0 : i32, i32
  }
  func.func @transform_7(%arg0: i32) -> (i32, i32) {
    %c0_i32 = arith.constant 0 : i32
    %c0_i32_0 = arith.constant 0 : i32
    %c0_i32_1 = arith.constant 0 : i32
    return %c0_i32, %c0_i32_0 : i32, i32
  }
}

</mosaic_0001>

<llo_original>
// kernel: token_decoder_forward.1
$region0: #{token_decoder_forward.1}
  #allocation0 [shape = 'u32[]', space=smem, size = 0x4, offset = 0x4, fixed_abs, tag = 'smem constant byte address 0x4 - core index']
  #allocation1 [shape = 'u32[144,128]{1,0:T(1,128)}', space=vmem, size = 0x12000, scoped, tag = 'internal scratch']
  %s0 = inlined_call_operand.vmem [shape: f32[32,128], index: 0, kind: input, shape index: {}]
  %s1 = inlined_call_operand.vmem [shape: f32[32,16], index: 1, kind: input, shape index: {}]
  %s2 = inlined_call_operand.vmem [shape: f32[88,32], index: 2, kind: input, shape index: {}]
  %s3 = inlined_call_operand.vmem [shape: f32[32,8], index: 3, kind: input, shape index: {}]
  %s4 = inlined_call_operand.vmem [shape: f32[32,64], index: 4, kind: input, shape index: {}]
  %s5 = inlined_call_operand.vmem [shape: f32[96,128], index: 5, kind: input, shape index: {}]
  %s6 = inlined_call_operand.vmem [shape: f32[16,1024], index: 6, kind: input, shape index: {}]
  %s7 = inlined_call_operand.vmem [shape: f32[32,128], index: 7, kind: output, shape index: {}]
  %s8 = sld [smem:[#allocation0]]
  $region38: #{token_decoder_forward.1} parent=0
    _
  %s10 = ssub.s32 1, %s8
  %s11 = scalar_select 0, %s10, %s8
  // Predicated region
  $region2: #{token_decoder_forward.1} parent=0 // pred_check
    _
  $region3: #{token_decoder_forward.1} parent=0 // pred_check_branch
    %13 = sbr.rel (0) target = $region5
  $region4: #{token_decoder_forward.1} parent=0 // pred_region
    _
  $region5: #{token_decoder_forward.1} parent=0 // pred_fallthru
    _
  // Predicated region
  $region6: #{token_decoder_forward.1} parent=0 // pred_check
    _
  $region7: #{token_decoder_forward.1} parent=0 // pred_check_branch
    %15 = sbr.rel (0) target = $region9
  $region8: #{token_decoder_forward.1} parent=0 // pred_region
    _
  $region9: #{token_decoder_forward.1} parent=0 // pred_fallthru
    _
  // Predicated region
  $region10: #{token_decoder_forward.1} parent=0 // pred_check
    _
  $region11: #{token_decoder_forward.1} parent=0 // pred_check_branch
    %17 = sbr.rel (0) target = $region13
  $region12: #{token_decoder_forward.1} parent=0 // pred_region
    _
  $region13: #{token_decoder_forward.1} parent=0 // pred_fallthru
    _
  // Predicated region
  $region14: #{token_decoder_forward.1} parent=0 // pred_check
    _
  $region15: #{token_decoder_forward.1} parent=0 // pred_check_branch
    %19 = sbr.rel (0) target = $region17
  $region16: #{token_decoder_forward.1} parent=0 // pred_region
    _
  $region17: #{token_decoder_forward.1} parent=0 // pred_fallthru
    _
  // Predicated region
  $region18: #{token_decoder_forward.1} parent=0 // pred_check
    _
  $region19: #{token_decoder_forward.1} parent=0 // pred_check_branch
    %21 = sbr.rel (0) target = $region21
  $region20: #{token_decoder_forward.1} parent=0 // pred_region
    _
  $region21: #{token_decoder_forward.1} parent=0 // pred_fallthru
    _
  // Predicated region
  $region22: #{token_decoder_forward.1} parent=0 // pred_check
    _
  $region23: #{token_decoder_forward.1} parent=0 // pred_check_branch
    %23 = sbr.rel (0) target = $region25
  $region24: #{token_decoder_forward.1} parent=0 // pred_region
    _
  $region25: #{token_decoder_forward.1} parent=0 // pred_fallthru
    _
  // Predicated region
  $region26: #{token_decoder_forward.1} parent=0 // pred_check
    _
  $region27: #{token_decoder_forward.1} parent=0 // pred_check_branch
    %25 = sbr.rel (0) target = $region29
  $region28: #{token_decoder_forward.1} parent=0 // pred_region
    _
  $region29: #{token_decoder_forward.1} parent=0 // pred_fallthru
    _
  %v26 = vld [vmem:[%s2] sm:$0xff]
  %v27 = vld [vmem:[%s2 + $0x8] sm:$0xff]
  %v28 = vld [vmem:[%s2 + $0x10] sm:$0xff]
  %v29 = vld [vmem:[%s2 + $0x18] sm:$0xff]
  %v30 = vld [vmem:[%s2 + $0x20] sm:$0xff]
  %v31 = vld [vmem:[%s2 + $0x28] sm:$0xff]
  %v32 = vld [vmem:[%s2 + $0x30] sm:$0xff]
  %v33 = vld [vmem:[%s2 + $0x38] sm:$0xff]
  %v34 = vld [vmem:[%s2 + $0x40] sm:$0xff]
  %v35 = vld [vmem:[%s2 + $0x48] sm:$0xff]
  %v36 = vld [vmem:[%s2 + $0x50] sm:$0xff]
  %v37 = vld [vmem:[%s3] sm:$0xff]
  %v38 = vld [vmem:[%s3 + $0x8] sm:$0xff]
  %v39 = vld [vmem:[%s3 + $0x10] sm:$0xff]
  %v40 = vld [vmem:[%s3 + $0x18] sm:$0xff]
  %v41 = vld [vmem:[%s4] sm:$0xff]
  %v42 = vld [vmem:[%s4 + $0x8] sm:$0xff]
  %v43 = vld [vmem:[%s4 + $0x10] sm:$0xff]
  %v44 = vld [vmem:[%s4 + $0x18] sm:$0xff]
  %v45 = vld [vmem:[%s5] sm:$0xff]
  %v46 = vld [vmem:[%s5 + $0x8] sm:$0xff]
  %v47 = vld [vmem:[%s5 + $0x10] sm:$0xff]
  %v48 = vld [vmem:[%s5 + $0x18] sm:$0xff]
  %v49 = vld [vmem:[%s5 + $0x20] sm:$0xff]
  %v50 = vld [vmem:[%s5 + $0x28] sm:$0xff]
  %v51 = vld [vmem:[%s5 + $0x30] sm:$0xff]
  %v52 = vld [vmem:[%s5 + $0x38] sm:$0xff]
  %v53 = vld [vmem:[%s5 + $0x40] sm:$0xff]
  %v54 = vld [vmem:[%s5 + $0x48] sm:$0xff]
  %v55 = vld [vmem:[%s5 + $0x50] sm:$0xff]
  %v56 = vld [vmem:[%s5 + $0x58] sm:$0xff]
  %v57 = vld [vmem:[%s6] sm:$0xff]
  %v58 = vld [vmem:[%s6 + $0x8] sm:$0xff]
  %v59 = vld [vmem:[%s6 + $0x10] sm:$0xff]
  %v60 = vld [vmem:[%s6 + $0x18] sm:$0xff]
  %v61 = vld [vmem:[%s6 + $0x20] sm:$0xff]
  %v62 = vld [vmem:[%s6 + $0x28] sm:$0xff]
  %v63 = vld [vmem:[%s6 + $0x30] sm:$0xff]
  %v64 = vld [vmem:[%s6 + $0x38] sm:$0xff]
  %v65 = vld [vmem:[%s6 + $0x40] sm:$0xff]
  %v66 = vld [vmem:[%s6 + $0x48] sm:$0xff]
  %v67 = vld [vmem:[%s6 + $0x50] sm:$0xff]
  %v68 = vld [vmem:[%s6 + $0x58] sm:$0xff]
  %v69 = vld [vmem:[%s6 + $0x60] sm:$0xff]
  %v70 = vld [vmem:[%s6 + $0x68] sm:$0xff]
  %v71 = vld [vmem:[%s6 + $0x70] sm:$0xff]
  %v72 = vld [vmem:[%s6 + $0x78] sm:$0xff]
  %v73 = vld [vmem:[%s0] sm:$0xff]
  %v74 = vld [vmem:[%s0 + $0x8] sm:$0xff]
  %v75 = vld [vmem:[%s0 + $0x10] sm:$0xff]
  %v76 = vld [vmem:[%s0 + $0x18] sm:$0xff]
  %v77 = vadd.f32 %v73, %v45
  %v78 = vadd.f32 %v74, %v46
  %v79 = vadd.f32 %v75, %v47
  %v80 = vadd.f32 %v76, %v48
  %v81 = vld [vmem:[%s1] sm:$0xff]
  %v82 = vld [vmem:[%s1 + $0x8] sm:$0xff]
  %v83 = vld [vmem:[%s1 + $0x10] sm:$0xff]
  %v84 = vld [vmem:[%s1 + $0x18] sm:$0xff]
  %vm85 = vcmask 261120
  %v87 = vsel %vm85, 0.03125, 0
  %89 = vmatprep.subr.mxu0 0.0
  %90 = vmatpush1.msra.mxu0 0.0
  %91 = vmatprep.subr.mxu0 0.0
  %92 = vmatpush1.msra.mxu0 0.0
  %93 = vmatprep.subr.mxu0 0.0
  %94 = vmatpush1.msra.mxu0 0.0
  %95 = vmatprep.subr.mxu0 0.0
  %96 = vmatpush1.msra.mxu0 0.0
  %97 = vmatprep.subr.mxu0 0.0
  %98 = vmatpush1.msra.mxu0 0.0
  %99 = vmatprep.subr.mxu0 0.0
  %100 = vmatpush1.msra.mxu0 0.0
  %101 = vmatprep.subr.mxu0 0.0
  %102 = vmatpush1.msra.mxu0 0.0
  %103 = vmatprep.subr.mxu0 0.0
  %104 = vmatpush1.msra.mxu0 0.0
  %105 = vmatprep.subr.mxu0 0.0
  %106 = vmatpush1.msra.mxu0 0.0
  %107 = vmatprep.subr.mxu0 0.0
  %108 = vmatpush1.msra.mxu0 0.0
  %109 = vmatprep.subr.mxu0 0.0
  %110 = vmatpush1.msra.mxu0 0.0
  %111 = vmatprep.subr.mxu0 0.0
  %112 = vmatpush1.msra.mxu0 0.0
  %113 = vmatprep.subr.mxu0 0.0
  %114 = vmatpush1.msra.mxu0 %v80
  %115 = vmatprep.subr.mxu0 0.0
  %116 = vmatpush1.msra.mxu0 %v79
  %117 = vmatprep.subr.mxu0 0.0
  %118 = vmatpush1.msra.mxu0 %v78
  %119 = vmatprep.subr.mxu0 0.0
  %120 = vmatpush1.msra.mxu0 %v77
  %121 = vmatprep.subr.mxu0 0.0
  %122 = vmatpush2.msra.mxu0 0.0
  %123 = vmatprep.subr.mxu0 0.0
  %124 = vmatpush2.msra.mxu0 0.0
  %125 = vmatprep.subr.mxu0 0.0
  %126 = vmatpush2.msra.mxu0 0.0
  %127 = vmatprep.subr.mxu0 0.0
  %128 = vmatpush2.msra.mxu0 0.0
  %129 = vmatprep.subr.mxu0 0.0
  %130 = vmatpush2.msra.mxu0 0.0
  %131 = vmatprep.subr.mxu0 0.0
  %132 = vmatpush2.msra.mxu0 0.0
  %133 = vmatprep.subr.mxu0 0.0
  %134 = vmatpush2.msra.mxu0 0.0
  %135 = vmatprep.subr.mxu0 0.0
  %136 = vmatpush2.msra.mxu0 0.0
  %137 = vmatprep.subr.mxu0 0.0
  %138 = vmatpush2.msra.mxu0 0.0
  %139 = vmatprep.subr.mxu0 0.0
  %140 = vmatpush2.msra.mxu0 0.0
  %141 = vmatprep.subr.mxu0 0.0
  %142 = vmatpush2.msra.mxu0 0.0
  %143 = vmatprep.subr.mxu0 0.0
  %144 = vmatpush2.msra.mxu0 0.0
  %145 = vmatprep.subr.mxu0 0.0
  %146 = vmatpush2.msra.mxu0 0.0
  %147 = vmatprep.subr.mxu0 0.0
  %148 = vmatpush2.msra.mxu0 0.0
  %149 = vmatprep.subr.mxu0 0.0
  %150 = vmatpush2.msra.mxu0 0.0
  %151 = vmatprep.subr.mxu0 0.0
  %152 = vmatpush2.msra.mxu0 0.0
  %153 = vmatprep.mubr.f32.mxu0 0.0
  %154 = vmatmul.mubr.f32.gmra.mxu0 %v87
  %v155 = vpop.f32.mrf.mxu0
  %v156 = vadd.f32 0.0, %v155
  %v157 = vpop.f32.mrf.mxu0
  %158 = vdwg.mxu0
  %v159 = vmul.f32 %v77, %v77
  %v160 = vmul.f32 %v78, %v78
  %v161 = vmul.f32 %v79, %v79
  %v162 = vmul.f32 %v80, %v80
  %163 = vmatprep.subr.mxu0 0.0
  %164 = vmatpush1.msra.mxu0 0.0
  %165 = vmatprep.subr.mxu0 0.0
  %166 = vmatpush1.msra.mxu0 0.0
  %167 = vmatprep.subr.mxu0 0.0
  %168 = vmatpush1.msra.mxu0 0.0
  %169 = vmatprep.subr.mxu0 0.0
  %170 = vmatpush1.msra.mxu0 0.0
  %171 = vmatprep.subr.mxu0 0.0
  %172 = vmatpush1.msra.mxu0 0.0
  %173 = vmatprep.subr.mxu0 0.0
  %174 = vmatpush1.msra.mxu0 0.0
  %175 = vmatprep.subr.mxu0 0.0
  %176 = vmatpush1.msra.mxu0 0.0
  %177 = vmatprep.subr.mxu0 0.0
  %178 = vmatpush1.msra.mxu0 0.0
  %179 = vmatprep.subr.mxu0 0.0
  %180 = vmatpush1.msra.mxu0 0.0
  %181 = vmatprep.subr.mxu0 0.0
  %182 = vmatpush1.msra.mxu0 0.0
  %183 = vmatprep.subr.mxu0 0.0
  %184 = vmatpush1.msra.mxu0 0.0
  %185 = vmatprep.subr.mxu0 0.0
  %186 = vmatpush1.msra.mxu0 0.0
  %187 = vmatprep.subr.mxu0 0.0
  %188 = vmatpush1.msra.mxu0 %v162
  %189 = vmatprep.subr.mxu0 0.0
  %190 = vmatpush1.msra.mxu0 %v161
  %191 = vmatprep.subr.mxu0 0.0
  %192 = vmatpush1.msra.mxu0 %v160
  %193 = vmatprep.subr.mxu0 0.0
  %194 = vmatpush1.msra.mxu0 %v159
  %195 = vmatprep.subr.mxu0 0.0
  %196 = vmatpush2.msra.mxu0 0.0
  %197 = vmatprep.subr.mxu0 0.0
  %198 = vmatpush2.msra.mxu0 0.0
  %199 = vmatprep.subr.mxu0 0.0
  %200 = vmatpush2.msra.mxu0 0.0
  %201 = vmatprep.subr.mxu0 0.0
  %202 = vmatpush2.msra.mxu0 0.0
  %203 = vmatprep.subr.mxu0 0.0
  %204 = vmatpush2.msra.mxu0 0.0
  %205 = vmatprep.subr.mxu0 0.0
  %206 = vmatpush2.msra.mxu0 0.0
  %207 = vmatprep.subr.mxu0 0.0
  %208 = vmatpush2.msra.mxu0 0.0
  %209 = vmatprep.subr.mxu0 0.0
  %210 = vmatpush2.msra.mxu0 0.0
  %211 = vmatprep.subr.mxu0 0.0
  %212 = vmatpush2.msra.mxu0 0.0
  %213 = vmatprep.subr.mxu0 0.0
  %214 = vmatpush2.msra.mxu0 0.0
  %215 = vmatprep.subr.mxu0 0.0
  %216 = vmatpush2.msra.mxu0 0.0
  %217 = vmatprep.subr.mxu0 0.0
  %218 = vmatpush2.msra.mxu0 0.0
  %219 = vmatprep.subr.mxu0 0.0
  %220 = vmatpush2.msra.mxu0 0.0
  %221 = vmatprep.subr.mxu0 0.0
  %222 = vmatpush2.msra.mxu0 0.0
  %223 = vmatprep.subr.mxu0 0.0
  %224 = vmatpush2.msra.mxu0 0.0
  %225 = vmatprep.subr.mxu0 0.0
  %226 = vmatpush2.msra.mxu0 0.0
  %227 = vmatprep.mubr.f32.mxu0 0.0
  %228 = vmatmul.mubr.f32.gmra.mxu0 %v87
  %v229 = vpop.f32.mrf.mxu0
  %v230 = vadd.f32 0.0, %v229
  %v231 = vpop.f32.mrf.mxu0
  %232 = vdwg.mxu0
  %v233 = vmul.f32 %v156, %v156
  %v234 = vsub.f32 %v230, %v233
  %v235 = vadd.f32 %v234, 1e-05
  %v236 = vrsqrt.pop %v235
  %v237 = vlaneseq
  %v238 = vshrl.u32 %v237, 7
  %v239 = vsub.s32 0, %v238
  %v240 = vrot.slane %v156, %v239
  %v241 = vsub.f32 %v77, %v240
  %v242 = vsub.f32 %v78, %v240
  %v243 = vsub.f32 %v79, %v240
  %v244 = vsub.f32 %v80, %v240
  %v245 = vlaneseq
  %v246 = vshrl.u32 %v245, 7
  %v247 = vsub.s32 0, %v246
  %v248 = vrot.slane %v236, %v247
  %v249 = vmul.f32 %v241, %v248
  %v250 = vmul.f32 %v242, %v248
  %v251 = vmul.f32 %v243, %v248
  %v252 = vmul.f32 %v244, %v248
  %254 = vset.pattern.permute.xlu0 0
  %255 = vperm.xlu0 %254, %v49
  %v256 = vpop.permute.xlu0 %255
  %259 = vset.pattern.permute.xlu0 0
  %260 = vperm.xlu0 %259, %v50
  %v261 = vpop.permute.xlu0 %260
  %264 = vset.pattern.permute.xlu0 0
  %265 = vperm.xlu0 %264, %v51
  %v266 = vpop.permute.xlu0 %265
  %269 = vset.pattern.permute.xlu0 0
  %270 = vperm.xlu0 %269, %v52
  %v271 = vpop.permute.xlu0 %270
  %v273 = vmul.f32 %v249, %v256
  %v274 = vmul.f32 %v250, %v261
  %v275 = vmul.f32 %v251, %v266
  %v276 = vmul.f32 %v252, %v271
  %277 = vset.pattern.permute.xlu0 1
  %278 = vperm.xlu0 %277, %v49
  %v279 = vpop.permute.xlu0 %278
  %281 = vset.pattern.permute.xlu0 1
  %282 = vperm.xlu0 %281, %v50
  %v283 = vpop.permute.xlu0 %282
  %285 = vset.pattern.permute.xlu0 1
  %286 = vperm.xlu0 %285, %v51
  %v287 = vpop.permute.xlu0 %286
  %289 = vset.pattern.permute.xlu0 1
  %290 = vperm.xlu0 %289, %v52
  %v291 = vpop.permute.xlu0 %290
  %v293 = vadd.f32 %v273, %v279
  %v294 = vadd.f32 %v274, %v283
  %v295 = vadd.f32 %v275, %v287
  %v296 = vadd.f32 %v276, %v291
  %297 = vmatprep.subr.mxu0 0.0
  %298 = vmatpush1.msra.mxu0 0.0
  %299 = vmatprep.subr.mxu0 0.0
  %300 = vmatpush1.msra.mxu0 0.0
  %301 = vmatprep.subr.mxu0 0.0
  %302 = vmatpush1.msra.mxu0 0.0
  %303 = vmatprep.subr.mxu0 0.0
  %304 = vmatpush1.msra.mxu0 0.0
  %305 = vmatprep.subr.mxu0 0.0
  %306 = vmatpush1.msra.mxu0 0.0
  %307 = vmatprep.subr.mxu0 0.0
  %308 = vmatpush1.msra.mxu0 0.0
  %309 = vmatprep.subr.mxu0 0.0
  %310 = vmatpush1.msra.mxu0 0.0
  %311 = vmatprep.subr.mxu0 0.0
  %312 = vmatpush1.msra.mxu0 0.0
  %313 = vmatprep.subr.mxu0 0.0
  %314 = vmatpush1.msra.mxu0 0.0
  %315 = vmatprep.subr.mxu0 0.0
  %316 = vmatpush1.msra.mxu0 0.0
  %317 = vmatprep.subr.mxu0 0.0
  %318 = vmatpush1.msra.mxu0 0.0
  %319 = vmatprep.subr.mxu0 0.0
  %320 = vmatpush1.msra.mxu0 0.0
  %321 = vmatprep.subr.mxu0 0.0
  %322 = vmatpush1.msra.mxu0 %v84
  %323 = vmatprep.subr.mxu0 0.0
  %324 = vmatpush1.msra.mxu0 %v83
  %325 = vmatprep.subr.mxu0 0.0
  %326 = vmatpush1.msra.mxu0 %v82
  %327 = vmatprep.subr.mxu0 0.0
  %328 = vmatpush1.msra.mxu0 %v81
  %329 = vmatprep.subr.mxu0 0.0
  %330 = vmatpush2.msra.mxu0 0.0
  %331 = vmatprep.subr.mxu0 0.0
  %332 = vmatpush2.msra.mxu0 0.0
  %333 = vmatprep.subr.mxu0 0.0
  %334 = vmatpush2.msra.mxu0 0.0
  %335 = vmatprep.subr.mxu0 0.0
  %336 = vmatpush2.msra.mxu0 0.0
  %337 = vmatprep.subr.mxu0 0.0
  %338 = vmatpush2.msra.mxu0 0.0
  %339 = vmatprep.subr.mxu0 0.0
  %340 = vmatpush2.msra.mxu0 0.0
  %341 = vmatprep.subr.mxu0 0.0
  %342 = vmatpush2.msra.mxu0 0.0
  %343 = vmatprep.subr.mxu0 0.0
  %344 = vmatpush2.msra.mxu0 0.0
  %345 = vmatprep.subr.mxu0 0.0
  %346 = vmatpush2.msra.mxu0 0.0
  %347 = vmatprep.subr.mxu0 0.0
  %348 = vmatpush2.msra.mxu0 0.0
  %349 = vmatprep.subr.mxu0 0.0
  %350 = vmatpush2.msra.mxu0 0.0
  %351 = vmatprep.subr.mxu0 0.0
  %352 = vmatpush2.msra.mxu0 0.0
  %353 = vmatprep.subr.mxu0 0.0
  %354 = vmatpush2.msra.mxu0 0.0
  %355 = vmatprep.subr.mxu0 0.0
  %356 = vmatpush2.msra.mxu0 0.0
  %357 = vmatprep.subr.mxu0 0.0
  %358 = vmatpush2.msra.mxu0 0.0
  %359 = vmatprep.subr.mxu0 0.0
  %360 = vmatpush2.msra.mxu0 0.0
  %361 = vmatprep.mubr.f32.mxu0 0.0
  %362 = vmatmul.mubr.f32.gmra.mxu0 %v87
  %v363 = vpop.f32.mrf.mxu0
  %v364 = vadd.f32 0.0, %v363
  %v365 = vpop.f32.mrf.mxu0
  %366 = vdwg.mxu0
  %v367 = vmul.f32 %v81, %v81
  %v368 = vmul.f32 %v82, %v82
  %v369 = vmul.f32 %v83, %v83
  %v370 = vmul.f32 %v84, %v84
  %371 = vmatprep.subr.mxu0 0.0
  %372 = vmatpush1.msra.mxu0 0.0
  %373 = vmatprep.subr.mxu0 0.0
  %374 = vmatpush1.msra.mxu0 0.0
  %375 = vmatprep.subr.mxu0 0.0
  %376 = vmatpush1.msra.mxu0 0.0
  %377 = vmatprep.subr.mxu0 0.0
  %378 = vmatpush1.msra.mxu0 0.0
  %379 = vmatprep.subr.mxu0 0.0
  %380 = vmatpush1.msra.mxu0 0.0
  %381 = vmatprep.subr.mxu0 0.0
  %382 = vmatpush1.msra.mxu0 0.0
  %383 = vmatprep.subr.mxu0 0.0
  %384 = vmatpush1.msra.mxu0 0.0
  %385 = vmatprep.subr.mxu0 0.0
  %386 = vmatpush1.msra.mxu0 0.0
  %387 = vmatprep.subr.mxu0 0.0
  %388 = vmatpush1.msra.mxu0 0.0
  %389 = vmatprep.subr.mxu0 0.0
  %390 = vmatpush1.msra.mxu0 0.0
  %391 = vmatprep.subr.mxu0 0.0
  %392 = vmatpush1.msra.mxu0 0.0
  %393 = vmatprep.subr.mxu0 0.0
  %394 = vmatpush1.msra.mxu0 0.0
  %395 = vmatprep.subr.mxu0 0.0
  %396 = vmatpush1.msra.mxu0 %v370
  %397 = vmatprep.subr.mxu0 0.0
  %398 = vmatpush1.msra.mxu0 %v369
  %399 = vmatprep.subr.mxu0 0.0
  %400 = vmatpush1.msra.mxu0 %v368
  %401 = vmatprep.subr.mxu0 0.0
  %402 = vmatpush1.msra.mxu0 %v367
  %403 = vmatprep.subr.mxu0 0.0
  %404 = vmatpush2.msra.mxu0 0.0
  %405 = vmatprep.subr.mxu0 0.0
  %406 = vmatpush2.msra.mxu0 0.0
  %407 = vmatprep.subr.mxu0 0.0
  %408 = vmatpush2.msra.mxu0 0.0
  %409 = vmatprep.subr.mxu0 0.0
  %410 = vmatpush2.msra.mxu0 0.0
  %411 = vmatprep.subr.mxu0 0.0
  %412 = vmatpush2.msra.mxu0 0.0
  %413 = vmatprep.subr.mxu0 0.0
  %414 = vmatpush2.msra.mxu0 0.0
  %415 = vmatprep.subr.mxu0 0.0
  %416 = vmatpush2.msra.mxu0 0.0
  %417 = vmatprep.subr.mxu0 0.0
  %418 = vmatpush2.msra.mxu0 0.0
  %419 = vmatprep.subr.mxu0 0.0
  %420 = vmatpush2.msra.mxu0 0.0
  %421 = vmatprep.subr.mxu0 0.0
  %422 = vmatpush2.msra.mxu0 0.0
  %423 = vmatprep.subr.mxu0 0.0
  %424 = vmatpush2.msra.mxu0 0.0
  %425 = vmatprep.subr.mxu0 0.0
  %426 = vmatpush2.msra.mxu0 0.0
  %427 = vmatprep.subr.mxu0 0.0
  %428 = vmatpush2.msra.mxu0 0.0
  %429 = vmatprep.subr.mxu0 0.0
  %430 = vmatpush2.msra.mxu0 0.0
  %431 = vmatprep.subr.mxu0 0.0
  %432 = vmatpush2.msra.mxu0 0.0
  %433 = vmatprep.subr.mxu0 0.0
  %434 = vmatpush2.msra.mxu0 0.0
  %435 = vmatprep.mubr.f32.mxu0 0.0
  %436 = vmatmul.mubr.f32.gmra.mxu0 %v87
  %v437 = vpop.f32.mrf.mxu0
  %v438 = vadd.f32 0.0, %v437
  %v439 = vpop.f32.mrf.mxu0
  %440 = vdwg.mxu0
  %v441 = vmul.f32 %v364, %v364
  %v442 = vsub.f32 %v438, %v441
  %v443 = vadd.f32 %v442, 1e-05
  %v444 = vrsqrt.pop %v443
  %v445 = vlaneseq
  %v446 = vshrl.u32 %v445, 7
  %v447 = vsub.s32 0, %v446
  %v448 = vrot.slane %v364, %v447
  %v449 = vsub.f32 %v81, %v448
  %v450 = vsub.f32 %v82, %v448
  %v451 = vsub.f32 %v83, %v448
  %v452 = vsub.f32 %v84, %v448
  %v453 = vlaneseq
  %v454 = vshrl.u32 %v453, 7
  %v455 = vsub.s32 0, %v454
  %v456 = vrot.slane %v444, %v455
  %v457 = vmul.f32 %v449, %v456
  %v458 = vmul.f32 %v450, %v456
  %v459 = vmul.f32 %v451, %v456
  %v460 = vmul.f32 %v452, %v456
  %v461 = vmul.f32 %v457, %v256
  %v462 = vmul.f32 %v458, %v261
  %v463 = vmul.f32 %v459, %v266
  %v464 = vmul.f32 %v460, %v271
  %v465 = vadd.f32 %v461, %v279
  %v466 = vadd.f32 %v462, %v283
  %v467 = vadd.f32 %v463, %v287
  %v468 = vadd.f32 %v464, %v291
  %v470 = vsel %vm85, %v26, 0
  %472 = vmatprep.subr.mxu0 0.0
  %473 = vmatpush1.msra.mxu0 0.0
  %474 = vmatprep.subr.mxu0 0.0
  %475 = vmatpush1.msra.mxu0 0.0
  %476 = vmatprep.subr.mxu0 0.0
  %477 = vmatpush1.msra.mxu0 0.0
  %478 = vmatprep.subr.mxu0 0.0
  %479 = vmatpush1.msra.mxu0 0.0
  %480 = vmatprep.subr.mxu0 0.0
  %481 = vmatpush1.msra.mxu0 0.0
  %482 = vmatprep.subr.mxu0 0.0
  %483 = vmatpush1.msra.mxu0 0.0
  %484 = vmatprep.subr.mxu0 0.0
  %485 = vmatpush1.msra.mxu0 0.0
  %486 = vmatprep.subr.mxu0 0.0
  %487 = vmatpush1.msra.mxu0 0.0
  %488 = vmatprep.subr.mxu0 0.0
  %489 = vmatpush1.msra.mxu0 0.0
  %490 = vmatprep.subr.mxu0 0.0
  %491 = vmatpush1.msra.mxu0 0.0
  %492 = vmatprep.subr.mxu0 0.0
  %493 = vmatpush1.msra.mxu0 0.0
  %494 = vmatprep.subr.mxu0 0.0
  %495 = vmatpush1.msra.mxu0 0.0
  %496 = vmatprep.subr.mxu0 0.0
  %497 = vmatpush1.msra.mxu0 %v296
  %498 = vmatprep.subr.mxu0 0.0
  %499 = vmatpush1.msra.mxu0 %v295
  %500 = vmatprep.subr.mxu0 0.0
  %501 = vmatpush1.msra.mxu0 %v294
  %502 = vmatprep.subr.mxu0 0.0
  %503 = vmatpush1.msra.mxu0 %v293
  %504 = vmatprep.subr.mxu0 0.0
  %505 = vmatpush2.msra.mxu0 0.0
  %506 = vmatprep.subr.mxu0 0.0
  %507 = vmatpush2.msra.mxu0 0.0
  %508 = vmatprep.subr.mxu0 0.0
  %509 = vmatpush2.msra.mxu0 0.0
  %510 = vmatprep.subr.mxu0 0.0
  %511 = vmatpush2.msra.mxu0 0.0
  %512 = vmatprep.subr.mxu0 0.0
  %513 = vmatpush2.msra.mxu0 0.0
  %514 = vmatprep.subr.mxu0 0.0
  %515 = vmatpush2.msra.mxu0 0.0
  %516 = vmatprep.subr.mxu0 0.0
  %517 = vmatpush2.msra.mxu0 0.0
  %518 = vmatprep.subr.mxu0 0.0
  %519 = vmatpush2.msra.mxu0 0.0
  %520 = vmatprep.subr.mxu0 0.0
  %521 = vmatpush2.msra.mxu0 0.0
  %522 = vmatprep.subr.mxu0 0.0
  %523 = vmatpush2.msra.mxu0 0.0
  %524 = vmatprep.subr.mxu0 0.0
  %525 = vmatpush2.msra.mxu0 0.0
  %526 = vmatprep.subr.mxu0 0.0
  %527 = vmatpush2.msra.mxu0 0.0
  %528 = vmatprep.subr.mxu0 0.0
  %529 = vmatpush2.msra.mxu0 0.0
  %530 = vmatprep.subr.mxu0 0.0
  %531 = vmatpush2.msra.mxu0 0.0
  %532 = vmatprep.subr.mxu0 0.0
  %533 = vmatpush2.msra.mxu0 0.0
  %534 = vmatprep.subr.mxu0 0.0
  %535 = vmatpush2.msra.mxu0 0.0
  %536 = vmatprep.mubr.f32.mxu0 0.0
  %537 = vmatmul.mubr.f32.gmra.mxu0 %v470
  %v538 = vpop.f32.mrf.mxu0
  %v539 = vadd.f32 0.0, %v538
  %v540 = vpop.f32.mrf.mxu0
  %541 = vdwg.mxu0
  %v543 = vsel %vm85, %v27, 0
  %v546 = vsel %vm85, %v28, 0
  %548 = vmatprep.subr.mxu0 0.0
  %549 = vmatpush1.msra.mxu0 0.0
  %550 = vmatprep.subr.mxu0 0.0
  %551 = vmatpush1.msra.mxu0 0.0
  %552 = vmatprep.subr.mxu0 0.0
  %553 = vmatpush1.msra.mxu0 0.0
  %554 = vmatprep.subr.mxu0 0.0
  %555 = vmatpush1.msra.mxu0 0.0
  %556 = vmatprep.subr.mxu0 0.0
  %557 = vmatpush1.msra.mxu0 0.0
  %558 = vmatprep.subr.mxu0 0.0
  %559 = vmatpush1.msra.mxu0 0.0
  %560 = vmatprep.subr.mxu0 0.0
  %561 = vmatpush1.msra.mxu0 0.0
  %562 = vmatprep.subr.mxu0 0.0
  %563 = vmatpush1.msra.mxu0 0.0
  %564 = vmatprep.subr.mxu0 0.0
  %565 = vmatpush1.msra.mxu0 0.0
  %566 = vmatprep.subr.mxu0 0.0
  %567 = vmatpush1.msra.mxu0 0.0
  %568 = vmatprep.subr.mxu0 0.0
  %569 = vmatpush1.msra.mxu0 0.0
  %570 = vmatprep.subr.mxu0 0.0
  %571 = vmatpush1.msra.mxu0 0.0
  %572 = vmatprep.subr.mxu0 0.0
  %573 = vmatpush1.msra.mxu0 %v468
  %574 = vmatprep.subr.mxu0 0.0
  %575 = vmatpush1.msra.mxu0 %v467
  %576 = vmatprep.subr.mxu0 0.0
  %577 = vmatpush1.msra.mxu0 %v466
  %578 = vmatprep.subr.mxu0 0.0
  %579 = vmatpush1.msra.mxu0 %v465
  %580 = vmatprep.subr.mxu0 0.0
  %581 = vmatpush2.msra.mxu0 0.0
  %582 = vmatprep.subr.mxu0 0.0
  %583 = vmatpush2.msra.mxu0 0.0
  %584 = vmatprep.subr.mxu0 0.0
  %585 = vmatpush2.msra.mxu0 0.0
  %586 = vmatprep.subr.mxu0 0.0
  %587 = vmatpush2.msra.mxu0 0.0
  %588 = vmatprep.subr.mxu0 0.0
  %589 = vmatpush2.msra.mxu0 0.0
  %590 = vmatprep.subr.mxu0 0.0
  %591 = vmatpush2.msra.mxu0 0.0
  %592 = vmatprep.subr.mxu0 0.0
  %593 = vmatpush2.msra.mxu0 0.0
  %594 = vmatprep.subr.mxu0 0.0
  %595 = vmatpush2.msra.mxu0 0.0
  %596 = vmatprep.subr.mxu0 0.0
  %597 = vmatpush2.msra.mxu0 0.0
  %598 = vmatprep.subr.mxu0 0.0
  %599 = vmatpush2.msra.mxu0 0.0
  %600 = vmatprep.subr.mxu0 0.0
  %601 = vmatpush2.msra.mxu0 0.0
  %602 = vmatprep.subr.mxu0 0.0
  %603 = vmatpush2.msra.mxu0 0.0
  %604 = vmatprep.subr.mxu0 0.0
  %605 = vmatpush2.msra.mxu0 0.0
  %606 = vmatprep.subr.mxu0 0.0
  %607 = vmatpush2.msra.mxu0 0.0
  %608 = vmatprep.subr.mxu0 0.0
  %609 = vmatpush2.msra.mxu0 0.0
  %610 = vmatprep.subr.mxu0 0.0
  %611 = vmatpush2.msra.mxu0 0.0
  %612 = vmatprep.mubr.f32.mxu0 0.0
  %613 = vmatmul.mubr.f32.gmra.mxu0 %v543
  %v614 = vpop.f32.mrf.mxu0
  %v615 = vadd.f32 0.0, %v614
  %v616 = vpop.f32.mrf.mxu0
  %617 = vmatprep.mubr.f32.mxu0 0.0
  %618 = vmatmul.mubr.f32.gmra.mxu0 %v546
  %v619 = vpop.f32.mrf.mxu0
  %v620 = vadd.f32 0.0, %v619
  %v621 = vpop.f32.mrf.mxu0
  %622 = vdwg.mxu0
  %vm623 = vcmask 130048
  %v625 = vsel %vm623, %v615, 0
  %v628 = vsel %vm623, %v620, 0
  %630 = vmatprep.subr.mxu0 0.0
  %631 = vmatpush1.msra.mxu0 0.0
  %632 = vmatprep.subr.mxu0 0.0
  %633 = vmatpush1.msra.mxu0 0.0
  %634 = vmatprep.subr.mxu0 0.0
  %635 = vmatpush1.msra.mxu0 0.0
  %636 = vmatprep.subr.mxu0 0.0
  %637 = vmatpush1.msra.mxu0 0.0
  %638 = vmatprep.subr.mxu0 0.0
  %639 = vmatpush1.msra.mxu0 0.0
  %640 = vmatprep.subr.mxu0 0.0
  %641 = vmatpush1.msra.mxu0 0.0
  %642 = vmatprep.subr.mxu0 0.0
  %643 = vmatpush1.msra.mxu0 0.0
  %644 = vmatprep.subr.mxu0 0.0
  %645 = vmatpush1.msra.mxu0 0.0
  %646 = vmatprep.subr.mxu0 0.0
  %647 = vmatpush1.msra.mxu0 0.0
  %648 = vmatprep.subr.mxu0 0.0
  %649 = vmatpush1.msra.mxu0 0.0
  %650 = vmatprep.subr.mxu0 0.0
  %651 = vmatpush1.msra.mxu0 0.0
  %652 = vmatprep.subr.mxu0 0.0
  %653 = vmatpush1.msra.mxu0 0.0
  %654 = vmatprep.subr.mxu0 0.0
  %655 = vmatpush1.msra.mxu0 0.0
  %656 = vmatprep.subr.mxu0 0.0
  %657 = vmatpush1.msra.mxu0 0.0
  %658 = vmatprep.subr.mxu0 %v66
  %659 = vmatpush1.msra.mxu0 %v65
  %660 = vmatprep.subr.mxu0 %v58
  %661 = vmatpush1.msra.mxu0 %v57
  %662 = vmatprep.subr.mxu0 0.0
  %663 = vmatpush2.msra.mxu0 0.0
  %664 = vmatprep.subr.mxu0 0.0
  %665 = vmatpush2.msra.mxu0 0.0
  %666 = vmatprep.subr.mxu0 0.0
  %667 = vmatpush2.msra.mxu0 0.0
  %668 = vmatprep.subr.mxu0 0.0
  %669 = vmatpush2.msra.mxu0 0.0
  %670 = vmatprep.subr.mxu0 0.0
  %671 = vmatpush2.msra.mxu0 0.0
  %672 = vmatprep.subr.mxu0 0.0
  %673 = vmatpush2.msra.mxu0 0.0
  %674 = vmatprep.subr.mxu0 0.0
  %675 = vmatpush2.msra.mxu0 0.0
  %676 = vmatprep.subr.mxu0 0.0
  %677 = vmatpush2.msra.mxu0 0.0
  %678 = vmatprep.subr.mxu0 0.0
  %679 = vmatpush2.msra.mxu0 0.0
  %680 = vmatprep.subr.mxu0 0.0
  %681 = vmatpush2.msra.mxu0 0.0
  %682 = vmatprep.subr.mxu0 0.0
  %683 = vmatpush2.msra.mxu0 0.0
  %684 = vmatprep.subr.mxu0 0.0
  %685 = vmatpush2.msra.mxu0 0.0
  %686 = vmatprep.subr.mxu0 0.0
  %687 = vmatpush2.msra.mxu0 0.0
  %688 = vmatprep.subr.mxu0 0.0
  %689 = vmatpush2.msra.mxu0 0.0
  %690 = vmatprep.subr.mxu0 0.0
  %691 = vmatpush2.msra.mxu0 0.0
  %692 = vmatprep.subr.mxu0 0.0
  %693 = vmatpush2.msra.mxu0 0.0
  %694 = vmatprep.mubr.f32.mxu0 0.0
  %695 = vmatmul.mubr.f32.gmra.mxu0 %v625
  %v696 = vpop.f32.mrf.mxu0
  %v697 = vadd.f32 0.0, %v696
  %v698 = vpop.f32.mrf.mxu0
  %v699 = vadd.f32 0.0, %v698
  %700 = vmatprep.mubr.f32.mxu0 0.0
  %701 = vmatmul.mubr.f32.gmra.mxu0 %v628
  %v702 = vpop.f32.mrf.mxu0
  %v703 = vadd.f32 0.0, %v702
  %v704 = vpop.f32.mrf.mxu0
  %v705 = vadd.f32 0.0, %v704
  %706 = vdwg.mxu0
  %707 = vmatprep.subr.mxu0 0.0
  %708 = vmatpush1.msra.mxu0 0.0
  %709 = vmatprep.subr.mxu0 0.0
  %710 = vmatpush1.msra.mxu0 0.0
  %711 = vmatprep.subr.mxu0 0.0
  %712 = vmatpush1.msra.mxu0 0.0
  %713 = vmatprep.subr.mxu0 0.0
  %714 = vmatpush1.msra.mxu0 0.0
  %715 = vmatprep.subr.mxu0 0.0
  %716 = vmatpush1.msra.mxu0 0.0
  %717 = vmatprep.subr.mxu0 0.0
  %718 = vmatpush1.msra.mxu0 0.0
  %719 = vmatprep.subr.mxu0 0.0
  %720 = vmatpush1.msra.mxu0 0.0
  %721 = vmatprep.subr.mxu0 0.0
  %722 = vmatpush1.msra.mxu0 0.0
  %723 = vmatprep.subr.mxu0 0.0
  %724 = vmatpush1.msra.mxu0 0.0
  %725 = vmatprep.subr.mxu0 0.0
  %726 = vmatpush1.msra.mxu0 0.0
  %727 = vmatprep.subr.mxu0 0.0
  %728 = vmatpush1.msra.mxu0 0.0
  %729 = vmatprep.subr.mxu0 0.0
  %730 = vmatpush1.msra.mxu0 0.0
  %731 = vmatprep.subr.mxu0 0.0
  %732 = vmatpush1.msra.mxu0 0.0
  %733 = vmatprep.subr.mxu0 0.0
  %734 = vmatpush1.msra.mxu0 0.0
  %735 = vmatprep.subr.mxu0 %v68
  %736 = vmatpush1.msra.mxu0 %v67
  %737 = vmatprep.subr.mxu0 %v60
  %738 = vmatpush1.msra.mxu0 %v59
  %739 = vmatprep.subr.mxu0 0.0
  %740 = vmatpush2.msra.mxu0 0.0
  %741 = vmatprep.subr.mxu0 0.0
  %742 = vmatpush2.msra.mxu0 0.0
  %743 = vmatprep.subr.mxu0 0.0
  %744 = vmatpush2.msra.mxu0 0.0
  %745 = vmatprep.subr.mxu0 0.0
  %746 = vmatpush2.msra.mxu0 0.0
  %747 = vmatprep.subr.mxu0 0.0
  %748 = vmatpush2.msra.mxu0 0.0
  %749 = vmatprep.subr.mxu0 0.0
  %750 = vmatpush2.msra.mxu0 0.0
  %751 = vmatprep.subr.mxu0 0.0
  %752 = vmatpush2.msra.mxu0 0.0
  %753 = vmatprep.subr.mxu0 0.0
  %754 = vmatpush2.msra.mxu0 0.0
  %755 = vmatprep.subr.mxu0 0.0
  %756 = vmatpush2.msra.mxu0 0.0
  %757 = vmatprep.subr.mxu0 0.0
  %758 = vmatpush2.msra.mxu0 0.0
  %759 = vmatprep.subr.mxu0 0.0
  %760 = vmatpush2.msra.mxu0 0.0
  %761 = vmatprep.subr.mxu0 0.0
  %762 = vmatpush2.msra.mxu0 0.0
  %763 = vmatprep.subr.mxu0 0.0
  %764 = vmatpush2.msra.mxu0 0.0
  %765 = vmatprep.subr.mxu0 0.0
  %766 = vmatpush2.msra.mxu0 0.0
  %767 = vmatprep.subr.mxu0 0.0
  %768 = vmatpush2.msra.mxu0 0.0
  %769 = vmatprep.subr.mxu0 0.0
  %770 = vmatpush2.msra.mxu0 0.0
  %771 = vmatprep.mubr.f32.mxu0 0.0
  %772 = vmatmul.mubr.f32.gmra.mxu0 %v625
  %v773 = vpop.f32.mrf.mxu0
  %v774 = vadd.f32 0.0, %v773
  %v775 = vpop.f32.mrf.mxu0
  %v776 = vadd.f32 0.0, %v775
  %777 = vmatprep.mubr.f32.mxu0 0.0
  %778 = vmatmul.mubr.f32.gmra.mxu0 %v628
  %v779 = vpop.f32.mrf.mxu0
  %v780 = vadd.f32 0.0, %v779
  %v781 = vpop.f32.mrf.mxu0
  %v782 = vadd.f32 0.0, %v781
  %783 = vdwg.mxu0
  %784 = vmatprep.subr.mxu0 0.0
  %785 = vmatpush1.msra.mxu0 0.0
  %786 = vmatprep.subr.mxu0 0.0
  %787 = vmatpush1.msra.mxu0 0.0
  %788 = vmatprep.subr.mxu0 0.0
  %789 = vmatpush1.msra.mxu0 0.0
  %790 = vmatprep.subr.mxu0 0.0
  %791 = vmatpush1.msra.mxu0 0.0
  %792 = vmatprep.subr.mxu0 0.0
  %793 = vmatpush1.msra.mxu0 0.0
  %794 = vmatprep.subr.mxu0 0.0
  %795 = vmatpush1.msra.mxu0 0.0
  %796 = vmatprep.subr.mxu0 0.0
  %797 = vmatpush1.msra.mxu0 0.0
  %798 = vmatprep.subr.mxu0 0.0
  %799 = vmatpush1.msra.mxu0 0.0
  %800 = vmatprep.subr.mxu0 0.0
  %801 = vmatpush1.msra.mxu0 0.0
  %802 = vmatprep.subr.mxu0 0.0
  %803 = vmatpush1.msra.mxu0 0.0
  %804 = vmatprep.subr.mxu0 0.0
  %805 = vmatpush1.msra.mxu0 0.0
  %806 = vmatprep.subr.mxu0 0.0
  %807 = vmatpush1.msra.mxu0 0.0
  %808 = vmatprep.subr.mxu0 0.0
  %809 = vmatpush1.msra.mxu0 0.0
  %810 = vmatprep.subr.mxu0 0.0
  %811 = vmatpush1.msra.mxu0 0.0
  %812 = vmatprep.subr.mxu0 %v70
  %813 = vmatpush1.msra.mxu0 %v69
  %814 = vmatprep.subr.mxu0 %v62
  %815 = vmatpush1.msra.mxu0 %v61
  %816 = vmatprep.subr.mxu0 0.0
  %817 = vmatpush2.msra.mxu0 0.0
  %818 = vmatprep.subr.mxu0 0.0
  %819 = vmatpush2.msra.mxu0 0.0
  %820 = vmatprep.subr.mxu0 0.0
  %821 = vmatpush2.msra.mxu0 0.0
  %822 = vmatprep.subr.mxu0 0.0
  %823 = vmatpush2.msra.mxu0 0.0
  %824 = vmatprep.subr.mxu0 0.0
  %825 = vmatpush2.msra.mxu0 0.0
  %826 = vmatprep.subr.mxu0 0.0
  %827 = vmatpush2.msra.mxu0 0.0
  %828 = vmatprep.subr.mxu0 0.0
  %829 = vmatpush2.msra.mxu0 0.0
  %830 = vmatprep.subr.mxu0 0.0
  %831 = vmatpush2.msra.mxu0 0.0
  %832 = vmatprep.subr.mxu0 0.0
  %833 = vmatpush2.msra.mxu0 0.0
  %834 = vmatprep.subr.mxu0 0.0
  %835 = vmatpush2.msra.mxu0 0.0
  %836 = vmatprep.subr.mxu0 0.0
  %837 = vmatpush2.msra.mxu0 0.0
  %838 = vmatprep.subr.mxu0 0.0
  %839 = vmatpush2.msra.mxu0 0.0
  %840 = vmatprep.subr.mxu0 0.0
  %841 = vmatpush2.msra.mxu0 0.0
  %842 = vmatprep.subr.mxu0 0.0
  %843 = vmatpush2.msra.mxu0 0.0
  %844 = vmatprep.subr.mxu0 0.0
  %845 = vmatpush2.msra.mxu0 0.0
  %846 = vmatprep.subr.mxu0 0.0
  %847 = vmatpush2.msra.mxu0 0.0
  %848 = vmatprep.mubr.f32.mxu0 0.0
  %849 = vmatmul.mubr.f32.gmra.mxu0 %v625
  %v850 = vpop.f32.mrf.mxu0
  %v851 = vadd.f32 0.0, %v850
  %v852 = vpop.f32.mrf.mxu0
  %v853 = vadd.f32 0.0, %v852
  %854 = vmatprep.mubr.f32.mxu0 0.0
  %855 = vmatmul.mubr.f32.gmra.mxu0 %v628
  %v856 = vpop.f32.mrf.mxu0
  %v857 = vadd.f32 0.0, %v856
  %v858 = vpop.f32.mrf.mxu0
  %v859 = vadd.f32 0.0, %v858
  %860 = vdwg.mxu0
  %861 = vmatprep.subr.mxu0 0.0
  %862 = vmatpush1.msra.mxu0 0.0
  %863 = vmatprep.subr.mxu0 0.0
  %864 = vmatpush1.msra.mxu0 0.0
  %865 = vmatprep.subr.mxu0 0.0
  %866 = vmatpush1.msra.mxu0 0.0
  %867 = vmatprep.subr.mxu0 0.0
  %868 = vmatpush1.msra.mxu0 0.0
  %869 = vmatprep.subr.mxu0 0.0
  %870 = vmatpush1.msra.mxu0 0.0
  %871 = vmatprep.subr.mxu0 0.0
  %872 = vmatpush1.msra.mxu0 0.0
  %873 = vmatprep.subr.mxu0 0.0
  %874 = vmatpush1.msra.mxu0 0.0
  %875 = vmatprep.subr.mxu0 0.0
  %876 = vmatpush1.msra.mxu0 0.0
  %877 = vmatprep.subr.mxu0 0.0
  %878 = vmatpush1.msra.mxu0 0.0
  %879 = vmatprep.subr.mxu0 0.0
  %880 = vmatpush1.msra.mxu0 0.0
  %881 = vmatprep.subr.mxu0 0.0
  %882 = vmatpush1.msra.mxu0 0.0
  %883 = vmatprep.subr.mxu0 0.0
  %884 = vmatpush1.msra.mxu0 0.0
  %885 = vmatprep.subr.mxu0 0.0
  %886 = vmatpush1.msra.mxu0 0.0
  %887 = vmatprep.subr.mxu0 0.0
  %888 = vmatpush1.msra.mxu0 0.0
  %889 = vmatprep.subr.mxu0 %v72
  %890 = vmatpush1.msra.mxu0 %v71
  %891 = vmatprep.subr.mxu0 %v64
  %892 = vmatpush1.msra.mxu0 %v63
  %893 = vmatprep.subr.mxu0 0.0
  %894 = vmatpush2.msra.mxu0 0.0
  %895 = vmatprep.subr.mxu0 0.0
  %896 = vmatpush2.msra.mxu0 0.0
  %897 = vmatprep.subr.mxu0 0.0
  %898 = vmatpush2.msra.mxu0 0.0
  %899 = vmatprep.subr.mxu0 0.0
  %900 = vmatpush2.msra.mxu0 0.0
  %901 = vmatprep.subr.mxu0 0.0
  %902 = vmatpush2.msra.mxu0 0.0
  %903 = vmatprep.subr.mxu0 0.0
  %904 = vmatpush2.msra.mxu0 0.0
  %905 = vmatprep.subr.mxu0 0.0
  %906 = vmatpush2.msra.mxu0 0.0
  %907 = vmatprep.subr.mxu0 0.0
  %908 = vmatpush2.msra.mxu0 0.0
  %909 = vmatprep.subr.mxu0 0.0
  %910 = vmatpush2.msra.mxu0 0.0
  %911 = vmatprep.subr.mxu0 0.0
  %912 = vmatpush2.msra.mxu0 0.0
  %913 = vmatprep.subr.mxu0 0.0
  %914 = vmatpush2.msra.mxu0 0.0
  %915 = vmatprep.subr.mxu0 0.0
  %916 = vmatpush2.msra.mxu0 0.0
  %917 = vmatprep.subr.mxu0 0.0
  %918 = vmatpush2.msra.mxu0 0.0
  %919 = vmatprep.subr.mxu0 0.0
  %920 = vmatpush2.msra.mxu0 0.0
  %921 = vmatprep.subr.mxu0 0.0
  %922 = vmatpush2.msra.mxu0 0.0
  %923 = vmatprep.subr.mxu0 0.0
  %924 = vmatpush2.msra.mxu0 0.0
  %925 = vmatprep.mubr.f32.mxu0 0.0
  %926 = vmatmul.mubr.f32.gmra.mxu0 %v625
  %v927 = vpop.f32.mrf.mxu0
  %v928 = vadd.f32 0.0, %v927
  %v929 = vpop.f32.mrf.mxu0
  %v930 = vadd.f32 0.0, %v929
  %931 = vmatprep.mubr.f32.mxu0 0.0
  %932 = vmatmul.mubr.f32.gmra.mxu0 %v628
  %v933 = vpop.f32.mrf.mxu0
  %v934 = vadd.f32 0.0, %v933
  %v935 = vpop.f32.mrf.mxu0
  %v936 = vadd.f32 0.0, %v935
  %937 = vdwg.mxu0
  %v938 = vmul.f32 %v539, %v697
  %v939 = vmul.f32 %v539, %v699
  %v940 = vmul.f32 %v539, %v774
  %v941 = vmul.f32 %v539, %v776
  %v942 = vmul.f32 %v539, %v851
  %v943 = vmul.f32 %v539, %v853
  %v944 = vmul.f32 %v539, %v928
  %v945 = vmul.f32 %v539, %v930
  %v946 = vmax.f32 %v938, %v939
  %v947 = vmax.f32 %v946, %v940
  %v948 = vmax.f32 %v947, %v941
  %v949 = vmax.f32 %v948, %v942
  %v950 = vmax.f32 %v949, %v943
  %v951 = vmax.f32 %v950, %v944
  %v952 = vmax.f32 %v951, %v945
  %v953 = vsub.f32 %v938, %v952
  %v954 = vmul.f32 %v953, 1.442695
  %v955 = vpow.pop %v954
  %v956 = vsub.f32 %v939, %v952
  %v957 = vmul.f32 %v956, 1.442695
  %v958 = vpow.pop %v957
  %v959 = vsub.f32 %v940, %v952
  %v960 = vmul.f32 %v959, 1.442695
  %v961 = vpow.pop %v960
  %v962 = vsub.f32 %v941, %v952
  %v963 = vmul.f32 %v962, 1.442695
  %v964 = vpow.pop %v963
  %v965 = vsub.f32 %v942, %v952
  %v966 = vmul.f32 %v965, 1.442695
  %v967 = vpow.pop %v966
  %v968 = vsub.f32 %v943, %v952
  %v969 = vmul.f32 %v968, 1.442695
  %v970 = vpow.pop %v969
  %v971 = vsub.f32 %v944, %v952
  %v972 = vmul.f32 %v971, 1.442695
  %v973 = vpow.pop %v972
  %v974 = vsub.f32 %v945, %v952
  %v975 = vmul.f32 %v974, 1.442695
  %v976 = vpow.pop %v975
  %v977 = vadd.f32 %v955, %v958
  %v978 = vadd.f32 %v977, %v961
  %v979 = vadd.f32 %v978, %v964
  %v980 = vadd.f32 %v979, %v967
  %v981 = vadd.f32 %v980, %v970
  %v982 = vadd.f32 %v981, %v973
  %v983 = vadd.f32 %v982, %v976
  %v984 = vmul.f32 %v955, %v703
  %v985 = vmul.f32 %v958, %v705
  %v986 = vadd.f32 %v984, %v985
  %v987 = vmul.f32 %v961, %v780
  %v988 = vadd.f32 %v986, %v987
  %v989 = vmul.f32 %v964, %v782
  %v990 = vadd.f32 %v988, %v989
  %v991 = vmul.f32 %v967, %v857
  %v992 = vadd.f32 %v990, %v991
  %v993 = vmul.f32 %v970, %v859
  %v994 = vadd.f32 %v992, %v993
  %v995 = vmul.f32 %v973, %v934
  %v996 = vadd.f32 %v994, %v995
  %v997 = vmul.f32 %v976, %v936
  %v998 = vadd.f32 %v996, %v997
  %v999 = vrcp.pop %v983
  %v1000 = vmul.f32 %v998, %v999
  %1001 = vset.pattern.permute.xlu0 2
  %1002 = vperm.xlu0 %1001, %v49
  %v1003 = vpop.permute.xlu0 %1002
  %1005 = vset.pattern.permute.xlu0 2
  %1006 = vperm.xlu0 %1005, %v50
  %v1007 = vpop.permute.xlu0 %1006
  %1009 = vset.pattern.permute.xlu0 2
  %1010 = vperm.xlu0 %1009, %v51
  %v1011 = vpop.permute.xlu0 %1010
  %1013 = vset.pattern.permute.xlu0 2
  %1014 = vperm.xlu0 %1013, %v52
  %v1015 = vpop.permute.xlu0 %1014
  %vm1017 = vcmask 64512
  %v1019 = vsel %vm1017, %v37, 0
  %v1022 = vsel %vm1017, %v38, 0
  %v1025 = vsel %vm1017, %v39, 0
  %v1028 = vsel %vm1017, %v40, 0
  %1030 = vmatprep.subr.mxu0 0.0
  %1031 = vmatpush1.msra.mxu0 0.0
  %1032 = vmatprep.subr.mxu0 0.0
  %1033 = vmatpush1.msra.mxu0 0.0
  %1034 = vmatprep.subr.mxu0 0.0
  %1035 = vmatpush1.msra.mxu0 0.0
  %1036 = vmatprep.subr.mxu0 0.0
  %1037 = vmatpush1.msra.mxu0 0.0
  %1038 = vmatprep.subr.mxu0 0.0
  %1039 = vmatpush1.msra.mxu0 0.0
  %1040 = vmatprep.subr.mxu0 0.0
  %1041 = vmatpush1.msra.mxu0 0.0
  %1042 = vmatprep.subr.mxu0 0.0
  %1043 = vmatpush1.msra.mxu0 0.0
  %1044 = vmatprep.subr.mxu0 0.0
  %1045 = vmatpush1.msra.mxu0 0.0
  %1046 = vmatprep.subr.mxu0 0.0
  %1047 = vmatpush1.msra.mxu0 0.0
  %1048 = vmatprep.subr.mxu0 0.0
  %1049 = vmatpush1.msra.mxu0 0.0
  %1050 = vmatprep.subr.mxu0 0.0
  %1051 = vmatpush1.msra.mxu0 0.0
  %1052 = vmatprep.subr.mxu0 0.0
  %1053 = vmatpush1.msra.mxu0 0.0
  %1054 = vmatprep.subr.mxu0 0.0
  %1055 = vmatpush1.msra.mxu0 0.0
  %1056 = vmatprep.subr.mxu0 0.0
  %1057 = vmatpush1.msra.mxu0 0.0
  %1058 = vmatprep.subr.mxu0 0.0
  %1059 = vmatpush1.msra.mxu0 0.0
  %1060 = vmatprep.subr.mxu0 0.0
  %1061 = vmatpush1.msra.mxu0 %v1000
  %1062 = vmatprep.subr.mxu0 0.0
  %1063 = vmatpush2.msra.mxu0 0.0
  %1064 = vmatprep.subr.mxu0 0.0
  %1065 = vmatpush2.msra.mxu0 0.0
  %1066 = vmatprep.subr.mxu0 0.0
  %1067 = vmatpush2.msra.mxu0 0.0
  %1068 = vmatprep.subr.mxu0 0.0
  %1069 = vmatpush2.msra.mxu0 0.0
  %1070 = vmatprep.subr.mxu0 0.0
  %1071 = vmatpush2.msra.mxu0 0.0
  %1072 = vmatprep.subr.mxu0 0.0
  %1073 = vmatpush2.msra.mxu0 0.0
  %1074 = vmatprep.subr.mxu0 0.0
  %1075 = vmatpush2.msra.mxu0 0.0
  %1076 = vmatprep.subr.mxu0 0.0
  %1077 = vmatpush2.msra.mxu0 0.0
  %1078 = vmatprep.subr.mxu0 0.0
  %1079 = vmatpush2.msra.mxu0 0.0
  %1080 = vmatprep.subr.mxu0 0.0
  %1081 = vmatpush2.msra.mxu0 0.0
  %1082 = vmatprep.subr.mxu0 0.0
  %1083 = vmatpush2.msra.mxu0 0.0
  %1084 = vmatprep.subr.mxu0 0.0
  %1085 = vmatpush2.msra.mxu0 0.0
  %1086 = vmatprep.subr.mxu0 0.0
  %1087 = vmatpush2.msra.mxu0 0.0
  %1088 = vmatprep.subr.mxu0 0.0
  %1089 = vmatpush2.msra.mxu0 0.0
  %1090 = vmatprep.subr.mxu0 0.0
  %1091 = vmatpush2.msra.mxu0 0.0
  %1092 = vmatprep.subr.mxu0 0.0
  %1093 = vmatpush2.msra.mxu0 0.0
  %1094 = vmatprep.mubr.f32.mxu0 0.0
  %1095 = vmatmul.mubr.f32.gmra.mxu0 %v1019
  %v1096 = vpop.f32.mrf.mxu0
  %v1097 = vadd.f32 %v1003, %v1096
  %v1098 = vpop.f32.mrf.mxu0
  %1099 = vmatprep.mubr.f32.mxu0 0.0
  %1100 = vmatmul.mubr.f32.gmra.mxu0 %v1022
  %v1101 = vpop.f32.mrf.mxu0
  %v1102 = vadd.f32 %v1007, %v1101
  %v1103 = vpop.f32.mrf.mxu0
  %1104 = vmatprep.mubr.f32.mxu0 0.0
  %1105 = vmatmul.mubr.f32.gmra.mxu0 %v1025
  %v1106 = vpop.f32.mrf.mxu0
  %v1107 = vadd.f32 %v1011, %v1106
  %v1108 = vpop.f32.mrf.mxu0
  %1109 = vmatprep.mubr.f32.mxu0 0.0
  %1110 = vmatmul.mubr.f32.gmra.mxu0 %v1028
  %v1111 = vpop.f32.mrf.mxu0
  %v1112 = vadd.f32 %v1015, %v1111
  %v1113 = vpop.f32.mrf.mxu0
  %1114 = vdwg.mxu0
  %v1115 = vadd.f32 %v77, %v1097
  %v1116 = vadd.f32 %v78, %v1102
  %v1117 = vadd.f32 %v79, %v1107
  %v1118 = vadd.f32 %v80, %v1112
  %1119 = vmatprep.subr.mxu0 0.0
  %1120 = vmatpush1.msra.mxu0 0.0
  %1121 = vmatprep.subr.mxu0 0.0
  %1122 = vmatpush1.msra.mxu0 0.0
  %1123 = vmatprep.subr.mxu0 0.0
  %1124 = vmatpush1.msra.mxu0 0.0
  %1125 = vmatprep.subr.mxu0 0.0
  %1126 = vmatpush1.msra.mxu0 0.0
  %1127 = vmatprep.subr.mxu0 0.0
  %1128 = vmatpush1.msra.mxu0 0.0
  %1129 = vmatprep.subr.mxu0 0.0
  %1130 = vmatpush1.msra.mxu0 0.0
  %1131 = vmatprep.subr.mxu0 0.0
  %1132 = vmatpush1.msra.mxu0 0.0
  %1133 = vmatprep.subr.mxu0 0.0
  %1134 = vmatpush1.msra.mxu0 0.0
  %1135 = vmatprep.subr.mxu0 0.0
  %1136 = vmatpush1.msra.mxu0 0.0
  %1137 = vmatprep.subr.mxu0 0.0
  %1138 = vmatpush1.msra.mxu0 0.0
  %1139 = vmatprep.subr.mxu0 0.0
  %1140 = vmatpush1.msra.mxu0 0.0
  %1141 = vmatprep.subr.mxu0 0.0
  %1142 = vmatpush1.msra.mxu0 0.0
  %1143 = vmatprep.subr.mxu0 0.0
  %1144 = vmatpush1.msra.mxu0 %v1118
  %1145 = vmatprep.subr.mxu0 0.0
  %1146 = vmatpush1.msra.mxu0 %v1117
  %1147 = vmatprep.subr.mxu0 0.0
  %1148 = vmatpush1.msra.mxu0 %v1116
  %1149 = vmatprep.subr.mxu0 0.0
  %1150 = vmatpush1.msra.mxu0 %v1115
  %1151 = vmatprep.subr.mxu0 0.0
  %1152 = vmatpush2.msra.mxu0 0.0
  %1153 = vmatprep.subr.mxu0 0.0
  %1154 = vmatpush2.msra.mxu0 0.0
  %1155 = vmatprep.subr.mxu0 0.0
  %1156 = vmatpush2.msra.mxu0 0.0
  %1157 = vmatprep.subr.mxu0 0.0
  %1158 = vmatpush2.msra.mxu0 0.0
  %1159 = vmatprep.subr.mxu0 0.0
  %1160 = vmatpush2.msra.mxu0 0.0
  %1161 = vmatprep.subr.mxu0 0.0
  %1162 = vmatpush2.msra.mxu0 0.0
  %1163 = vmatprep.subr.mxu0 0.0
  %1164 = vmatpush2.msra.mxu0 0.0
  %1165 = vmatprep.subr.mxu0 0.0
  %1166 = vmatpush2.msra.mxu0 0.0
  %1167 = vmatprep.subr.mxu0 0.0
  %1168 = vmatpush2.msra.mxu0 0.0
  %1169 = vmatprep.subr.mxu0 0.0
  %1170 = vmatpush2.msra.mxu0 0.0
  %1171 = vmatprep.subr.mxu0 0.0
  %1172 = vmatpush2.msra.mxu0 0.0
  %1173 = vmatprep.subr.mxu0 0.0
  %1174 = vmatpush2.msra.mxu0 0.0
  %1175 = vmatprep.subr.mxu0 0.0
  %1176 = vmatpush2.msra.mxu0 0.0
  %1177 = vmatprep.subr.mxu0 0.0
  %1178 = vmatpush2.msra.mxu0 0.0
  %1179 = vmatprep.subr.mxu0 0.0
  %1180 = vmatpush2.msra.mxu0 0.0
  %1181 = vmatprep.subr.mxu0 0.0
  %1182 = vmatpush2.msra.mxu0 0.0
  %1183 = vmatprep.mubr.f32.mxu0 0.0
  %1184 = vmatmul.mubr.f32.gmra.mxu0 %v87
  %v1185 = vpop.f32.mrf.mxu0
  %v1186 = vadd.f32 0.0, %v1185
  %v1187 = vpop.f32.mrf.mxu0
  %1188 = vdwg.mxu0
  %v1189 = vmul.f32 %v1115, %v1115
  %v1190 = vmul.f32 %v1116, %v1116
  %v1191 = vmul.f32 %v1117, %v1117
  %v1192 = vmul.f32 %v1118, %v1118
  %1193 = vmatprep.subr.mxu0 0.0
  %1194 = vmatpush1.msra.mxu0 0.0
  %1195 = vmatprep.subr.mxu0 0.0
  %1196 = vmatpush1.msra.mxu0 0.0
  %1197 = vmatprep.subr.mxu0 0.0
  %1198 = vmatpush1.msra.mxu0 0.0
  %1199 = vmatprep.subr.mxu0 0.0
  %1200 = vmatpush1.msra.mxu0 0.0
  %1201 = vmatprep.subr.mxu0 0.0
  %1202 = vmatpush1.msra.mxu0 0.0
  %1203 = vmatprep.subr.mxu0 0.0
  %1204 = vmatpush1.msra.mxu0 0.0
  %1205 = vmatprep.subr.mxu0 0.0
  %1206 = vmatpush1.msra.mxu0 0.0
  %1207 = vmatprep.subr.mxu0 0.0
  %1208 = vmatpush1.msra.mxu0 0.0
  %1209 = vmatprep.subr.mxu0 0.0
  %1210 = vmatpush1.msra.mxu0 0.0
  %1211 = vmatprep.subr.mxu0 0.0
  %1212 = vmatpush1.msra.mxu0 0.0
  %1213 = vmatprep.subr.mxu0 0.0
  %1214 = vmatpush1.msra.mxu0 0.0
  %1215 = vmatprep.subr.mxu0 0.0
  %1216 = vmatpush1.msra.mxu0 0.0
  %1217 = vmatprep.subr.mxu0 0.0
  %1218 = vmatpush1.msra.mxu0 %v1192
  %1219 = vmatprep.subr.mxu0 0.0
  %1220 = vmatpush1.msra.mxu0 %v1191
  %1221 = vmatprep.subr.mxu0 0.0
  %1222 = vmatpush1.msra.mxu0 %v1190
  %1223 = vmatprep.subr.mxu0 0.0
  %1224 = vmatpush1.msra.mxu0 %v1189
  %1225 = vmatprep.subr.mxu0 0.0
  %1226 = vmatpush2.msra.mxu0 0.0
  %1227 = vmatprep.subr.mxu0 0.0
  %1228 = vmatpush2.msra.mxu0 0.0
  %1229 = vmatprep.subr.mxu0 0.0
  %1230 = vmatpush2.msra.mxu0 0.0
  %1231 = vmatprep.subr.mxu0 0.0
  %1232 = vmatpush2.msra.mxu0 0.0
  %1233 = vmatprep.subr.mxu0 0.0
  %1234 = vmatpush2.msra.mxu0 0.0
  %1235 = vmatprep.subr.mxu0 0.0
  %1236 = vmatpush2.msra.mxu0 0.0
  %1237 = vmatprep.subr.mxu0 0.0
  %1238 = vmatpush2.msra.mxu0 0.0
  %1239 = vmatprep.subr.mxu0 0.0
  %1240 = vmatpush2.msra.mxu0 0.0
  %1241 = vmatprep.subr.mxu0 0.0
  %1242 = vmatpush2.msra.mxu0 0.0
  %1243 = vmatprep.subr.mxu0 0.0
  %1244 = vmatpush2.msra.mxu0 0.0
  %1245 = vmatprep.subr.mxu0 0.0
  %1246 = vmatpush2.msra.mxu0 0.0
  %1247 = vmatprep.subr.mxu0 0.0
  %1248 = vmatpush2.msra.mxu0 0.0
  %1249 = vmatprep.subr.mxu0 0.0
  %1250 = vmatpush2.msra.mxu0 0.0
  %1251 = vmatprep.subr.mxu0 0.0
  %1252 = vmatpush2.msra.mxu0 0.0
  %1253 = vmatprep.subr.mxu0 0.0
  %1254 = vmatpush2.msra.mxu0 0.0
  %1255 = vmatprep.subr.mxu0 0.0
  %1256 = vmatpush2.msra.mxu0 0.0
  %1257 = vmatprep.mubr.f32.mxu0 0.0
  %1258 = vmatmul.mubr.f32.gmra.mxu0 %v87
  %v1259 = vpop.f32.mrf.mxu0
  %v1260 = vadd.f32 0.0, %v1259
  %v1261 = vpop.f32.mrf.mxu0
  %1262 = vdwg.mxu0
  %v1263 = vmul.f32 %v1186, %v1186
  %v1264 = vsub.f32 %v1260, %v1263
  %v1265 = vadd.f32 %v1264, 1e-05
  %v1266 = vrsqrt.pop %v1265
  %v1267 = vlaneseq
  %v1268 = vshrl.u32 %v1267, 7
  %v1269 = vsub.s32 0, %v1268
  %v1270 = vrot.slane %v1186, %v1269
  %v1271 = vsub.f32 %v1115, %v1270
  %v1272 = vsub.f32 %v1116, %v1270
  %v1273 = vsub.f32 %v1117, %v1270
  %v1274 = vsub.f32 %v1118, %v1270
  %v1275 = vlaneseq
  %v1276 = vshrl.u32 %v1275, 7
  %v1277 = vsub.s32 0, %v1276
  %v1278 = vrot.slane %v1266, %v1277
  %v1279 = vmul.f32 %v1271, %v1278
  %v1280 = vmul.f32 %v1272, %v1278
  %v1281 = vmul.f32 %v1273, %v1278
  %v1282 = vmul.f32 %v1274, %v1278
  %1283 = vset.pattern.permute.xlu0 3
  %1284 = vperm.xlu0 %1283, %v49
  %v1285 = vpop.permute.xlu0 %1284
  %1287 = vset.pattern.permute.xlu0 3
  %1288 = vperm.xlu0 %1287, %v50
  %v1289 = vpop.permute.xlu0 %1288
  %1291 = vset.pattern.permute.xlu0 3
  %1292 = vperm.xlu0 %1291, %v51
  %v1293 = vpop.permute.xlu0 %1292
  %1295 = vset.pattern.permute.xlu0 3
  %1296 = vperm.xlu0 %1295, %v52
  %v1297 = vpop.permute.xlu0 %1296
  %v1299 = vmul.f32 %v1279, %v1285
  %v1300 = vmul.f32 %v1280, %v1289
  %v1301 = vmul.f32 %v1281, %v1293
  %v1302 = vmul.f32 %v1282, %v1297
  %1303 = vset.pattern.permute.xlu0 4
  %1304 = vperm.xlu0 %1303, %v49
  %v1305 = vpop.permute.xlu0 %1304
  %1307 = vset.pattern.permute.xlu0 4
  %1308 = vperm.xlu0 %1307, %v50
  %v1309 = vpop.permute.xlu0 %1308
  %1311 = vset.pattern.permute.xlu0 4
  %1312 = vperm.xlu0 %1311, %v51
  %v1313 = vpop.permute.xlu0 %1312
  %1315 = vset.pattern.permute.xlu0 4
  %1316 = vperm.xlu0 %1315, %v52
  %v1317 = vpop.permute.xlu0 %1316
  %v1319 = vadd.f32 %v1299, %v1305
  %v1320 = vadd.f32 %v1300, %v1309
  %v1321 = vadd.f32 %v1301, %v1313
  %v1322 = vadd.f32 %v1302, %v1317
  %1323 = vset.pattern.permute.xlu0 6
  %1324 = vperm.xlu0 %1323, %v49
  %v1325 = vpop.permute.xlu0 %1324
  %1327 = vset.pattern.permute.xlu0 6
  %1328 = vperm.xlu0 %1327, %v50
  %v1329 = vpop.permute.xlu0 %1328
  %1331 = vset.pattern.permute.xlu0 6
  %1332 = vperm.xlu0 %1331, %v51
  %v1333 = vpop.permute.xlu0 %1332
  %1335 = vset.pattern.permute.xlu0 6
  %1336 = vperm.xlu0 %1335, %v52
  %v1337 = vpop.permute.xlu0 %1336
  %1340 = vset.pattern.permute.xlu0 6
  %1341 = vperm.xlu0 %1340, %v53
  %v1342 = vpop.permute.xlu0 %1341
  %1345 = vset.pattern.permute.xlu0 6
  %1346 = vperm.xlu0 %1345, %v54
  %v1347 = vpop.permute.xlu0 %1346
  %1350 = vset.pattern.permute.xlu0 6
  %1351 = vperm.xlu0 %1350, %v55
  %v1352 = vpop.permute.xlu0 %1351
  %1355 = vset.pattern.permute.xlu0 6
  %1356 = vperm.xlu0 %1355, %v56
  %v1357 = vpop.permute.xlu0 %1356
  %v1360 = vsel %vm85, %v29, 0
  %v1363 = vsel %vm85, %v30, 0
  %v1366 = vsel %vm85, %v31, 0
  %v1369 = vsel %vm85, %v32, 0
  %v1372 = vsel %vm85, %v33, 0
  %v1375 = vsel %vm85, %v34, 0
  %v1378 = vsel %vm85, %v35, 0
  %v1381 = vsel %vm85, %v36, 0
  %1383 = vmatprep.subr.mxu0 0.0
  %1384 = vmatpush1.msra.mxu0 0.0
  %1385 = vmatprep.subr.mxu0 0.0
  %1386 = vmatpush1.msra.mxu0 0.0
  %1387 = vmatprep.subr.mxu0 0.0
  %1388 = vmatpush1.msra.mxu0 0.0
  %1389 = vmatprep.subr.mxu0 0.0
  %1390 = vmatpush1.msra.mxu0 0.0
  %1391 = vmatprep.subr.mxu0 0.0
  %1392 = vmatpush1.msra.mxu0 0.0
  %1393 = vmatprep.subr.mxu0 0.0
  %1394 = vmatpush1.msra.mxu0 0.0
  %1395 = vmatprep.subr.mxu0 0.0
  %1396 = vmatpush1.msra.mxu0 0.0
  %1397 = vmatprep.subr.mxu0 0.0
  %1398 = vmatpush1.msra.mxu0 0.0
  %1399 = vmatprep.subr.mxu0 0.0
  %1400 = vmatpush1.msra.mxu0 0.0
  %1401 = vmatprep.subr.mxu0 0.0
  %1402 = vmatpush1.msra.mxu0 0.0
  %1403 = vmatprep.subr.mxu0 0.0
  %1404 = vmatpush1.msra.mxu0 0.0
  %1405 = vmatprep.subr.mxu0 0.0
  %1406 = vmatpush1.msra.mxu0 0.0
  %1407 = vmatprep.subr.mxu0 0.0
  %1408 = vmatpush1.msra.mxu0 %v1322
  %1409 = vmatprep.subr.mxu0 0.0
  %1410 = vmatpush1.msra.mxu0 %v1321
  %1411 = vmatprep.subr.mxu0 0.0
  %1412 = vmatpush1.msra.mxu0 %v1320
  %1413 = vmatprep.subr.mxu0 0.0
  %1414 = vmatpush1.msra.mxu0 %v1319
  %1415 = vmatprep.subr.mxu0 0.0
  %1416 = vmatpush2.msra.mxu0 0.0
  %1417 = vmatprep.subr.mxu0 0.0
  %1418 = vmatpush2.msra.mxu0 0.0
  %1419 = vmatprep.subr.mxu0 0.0
  %1420 = vmatpush2.msra.mxu0 0.0
  %1421 = vmatprep.subr.mxu0 0.0
  %1422 = vmatpush2.msra.mxu0 0.0
  %1423 = vmatprep.subr.mxu0 0.0
  %1424 = vmatpush2.msra.mxu0 0.0
  %1425 = vmatprep.subr.mxu0 0.0
  %1426 = vmatpush2.msra.mxu0 0.0
  %1427 = vmatprep.subr.mxu0 0.0
  %1428 = vmatpush2.msra.mxu0 0.0
  %1429 = vmatprep.subr.mxu0 0.0
  %1430 = vmatpush2.msra.mxu0 0.0
  %1431 = vmatprep.subr.mxu0 0.0
  %1432 = vmatpush2.msra.mxu0 0.0
  %1433 = vmatprep.subr.mxu0 0.0
  %1434 = vmatpush2.msra.mxu0 0.0
  %1435 = vmatprep.subr.mxu0 0.0
  %1436 = vmatpush2.msra.mxu0 0.0
  %1437 = vmatprep.subr.mxu0 0.0
  %1438 = vmatpush2.msra.mxu0 0.0
  %1439 = vmatprep.subr.mxu0 0.0
  %1440 = vmatpush2.msra.mxu0 0.0
  %1441 = vmatprep.subr.mxu0 0.0
  %1442 = vmatpush2.msra.mxu0 0.0
  %1443 = vmatprep.subr.mxu0 0.0
  %1444 = vmatpush2.msra.mxu0 0.0
  %1445 = vmatprep.subr.mxu0 0.0
  %1446 = vmatpush2.msra.mxu0 0.0
  %1447 = vmatprep.mubr.f32.mxu0 0.0
  %1448 = vmatmul.mubr.f32.gmra.mxu0 %v1360
  %v1449 = vpop.f32.mrf.mxu0
  %v1450 = vadd.f32 %v1325, %v1449
  %v1451 = vpop.f32.mrf.mxu0
  %1452 = vmatprep.mubr.f32.mxu0 0.0
  %1453 = vmatmul.mubr.f32.gmra.mxu0 %v1363
  %v1454 = vpop.f32.mrf.mxu0
  %v1455 = vadd.f32 %v1329, %v1454
  %v1456 = vpop.f32.mrf.mxu0
  %1457 = vmatprep.mubr.f32.mxu0 0.0
  %1458 = vmatmul.mubr.f32.gmra.mxu0 %v1366
  %v1459 = vpop.f32.mrf.mxu0
  %v1460 = vadd.f32 %v1333, %v1459
  %v1461 = vpop.f32.mrf.mxu0
  %1462 = vmatprep.mubr.f32.mxu0 0.0
  %1463 = vmatmul.mubr.f32.gmra.mxu0 %v1369
  %v1464 = vpop.f32.mrf.mxu0
  %v1465 = vadd.f32 %v1337, %v1464
  %v1466 = vpop.f32.mrf.mxu0
  %1467 = vmatprep.mubr.f32.mxu0 0.0
  %1468 = vmatmul.mubr.f32.gmra.mxu0 %v1372
  %v1469 = vpop.f32.mrf.mxu0
  %v1470 = vadd.f32 %v1342, %v1469
  %v1471 = vpop.f32.mrf.mxu0
  %1472 = vmatprep.mubr.f32.mxu0 0.0
  %1473 = vmatmul.mubr.f32.gmra.mxu0 %v1375
  %v1474 = vpop.f32.mrf.mxu0
  %v1475 = vadd.f32 %v1347, %v1474
  %v1476 = vpop.f32.mrf.mxu0
  %1477 = vmatprep.mubr.f32.mxu0 0.0
  %1478 = vmatmul.mubr.f32.gmra.mxu0 %v1378
  %v1479 = vpop.f32.mrf.mxu0
  %v1480 = vadd.f32 %v1352, %v1479
  %v1481 = vpop.f32.mrf.mxu0
  %1482 = vmatprep.mubr.f32.mxu0 0.0
  %1483 = vmatmul.mubr.f32.gmra.mxu0 %v1381
  %v1484 = vpop.f32.mrf.mxu0
  %v1485 = vadd.f32 %v1357, %v1484
  %v1486 = vpop.f32.mrf.mxu0
  %1487 = vdwg.mxu0
  %v1488 = vmul.f32 %v1450, 0.5
  %v1489 = vmul.f32 %v1455, 0.5
  %v1490 = vmul.f32 %v1460, 0.5
  %v1491 = vmul.f32 %v1465, 0.5
  %v1492 = vmul.f32 %v1470, 0.5
  %v1493 = vmul.f32 %v1475, 0.5
  %v1494 = vmul.f32 %v1480, 0.5
  %v1495 = vmul.f32 %v1485, 0.5
  %v1496 = vmul.f32 %v1450, 0.044715
  %v1497 = vmul.f32 %v1455, 0.044715
  %v1498 = vmul.f32 %v1460, 0.044715
  %v1499 = vmul.f32 %v1465, 0.044715
  %v1500 = vmul.f32 %v1470, 0.044715
  %v1501 = vmul.f32 %v1475, 0.044715
  %v1502 = vmul.f32 %v1480, 0.044715
  %v1503 = vmul.f32 %v1485, 0.044715
  %v1504 = vmul.f32 %v1496, %v1450
  %v1505 = vmul.f32 %v1497, %v1455
  %v1506 = vmul.f32 %v1498, %v1460
  %v1507 = vmul.f32 %v1499, %v1465
  %v1508 = vmul.f32 %v1500, %v1470
  %v1509 = vmul.f32 %v1501, %v1475
  %v1510 = vmul.f32 %v1502, %v1480
  %v1511 = vmul.f32 %v1503, %v1485
  %v1512 = vmul.f32 %v1504, %v1450
  %v1513 = vmul.f32 %v1505, %v1455
  %v1514 = vmul.f32 %v1506, %v1460
  %v1515 = vmul.f32 %v1507, %v1465
  %v1516 = vmul.f32 %v1508, %v1470
  %v1517 = vmul.f32 %v1509, %v1475
  %v1518 = vmul.f32 %v1510, %v1480
  %v1519 = vmul.f32 %v1511, %v1485
  %v1520 = vadd.f32 %v1450, %v1512
  %v1521 = vadd.f32 %v1455, %v1513
  %v1522 = vadd.f32 %v1460, %v1514
  %v1523 = vadd.f32 %v1465, %v1515
  %v1524 = vadd.f32 %v1470, %v1516
  %v1525 = vadd.f32 %v1475, %v1517
  %v1526 = vadd.f32 %v1480, %v1518
  %v1527 = vadd.f32 %v1485, %v1519
  %v1528 = vmul.f32 %v1520, 0.7978846
  %v1529 = vmul.f32 %v1521, 0.7978846
  %v1530 = vmul.f32 %v1522, 0.7978846
  %v1531 = vmul.f32 %v1523, 0.7978846
  %v1532 = vmul.f32 %v1524, 0.7978846
  %v1533 = vmul.f32 %v1525, 0.7978846
  %v1534 = vmul.f32 %v1526, 0.7978846
  %v1535 = vmul.f32 %v1527, 0.7978846
  %v1536 = vtanh.pop %v1528
  %v1537 = vtanh.pop %v1529
  %v1538 = vtanh.pop %v1530
  %v1539 = vtanh.pop %v1531
  %v1540 = vtanh.pop %v1532
  %v1541 = vtanh.pop %v1533
  %v1542 = vtanh.pop %v1534
  %v1543 = vtanh.pop %v1535
  %v1544 = vadd.f32 %v1536, 1.0
  %v1545 = vadd.f32 %v1537, 1.0
  %v1546 = vadd.f32 %v1538, 1.0
  %v1547 = vadd.f32 %v1539, 1.0
  %v1548 = vadd.f32 %v1540, 1.0
  %v1549 = vadd.f32 %v1541, 1.0
  %v1550 = vadd.f32 %v1542, 1.0
  %v1551 = vadd.f32 %v1543, 1.0
  %v1552 = vmul.f32 %v1488, %v1544
  %v1553 = vmul.f32 %v1489, %v1545
  %v1554 = vmul.f32 %v1490, %v1546
  %v1555 = vmul.f32 %v1491, %v1547
  %v1556 = vmul.f32 %v1492, %v1548
  %v1557 = vmul.f32 %v1493, %v1549
  %v1558 = vmul.f32 %v1494, %v1550
  %v1559 = vmul.f32 %v1495, %v1551
  %1560 = vset.pattern.permute.xlu0 5
  %1561 = vperm.xlu0 %1560, %v49
  %v1562 = vpop.permute.xlu0 %1561
  %1564 = vset.pattern.permute.xlu0 5
  %1565 = vperm.xlu0 %1564, %v50
  %v1566 = vpop.permute.xlu0 %1565
  %1568 = vset.pattern.permute.xlu0 5
  %1569 = vperm.xlu0 %1568, %v51
  %v1570 = vpop.permute.xlu0 %1569
  %1572 = vset.pattern.permute.xlu0 5
  %1573 = vperm.xlu0 %1572, %v52
  %v1574 = vpop.permute.xlu0 %1573
  %vm1576 = vcmask 523264
  %v1578 = vsel %vm1576, %v41, 0
  %v1581 = vsel %vm1576, %v42, 0
  %v1584 = vsel %vm1576, %v43, 0
  %v1587 = vsel %vm1576, %v44, 0
  %1589 = vmatprep.subr.mxu0 0.0
  %1590 = vmatpush1.msra.mxu0 0.0
  %1591 = vmatprep.subr.mxu0 0.0
  %1592 = vmatpush1.msra.mxu0 0.0
  %1593 = vmatprep.subr.mxu0 0.0
  %1594 = vmatpush1.msra.mxu0 0.0
  %1595 = vmatprep.subr.mxu0 0.0
  %1596 = vmatpush1.msra.mxu0 0.0
  %1597 = vmatprep.subr.mxu0 0.0
  %1598 = vmatpush1.msra.mxu0 0.0
  %1599 = vmatprep.subr.mxu0 0.0
  %1600 = vmatpush1.msra.mxu0 0.0
  %1601 = vmatprep.subr.mxu0 0.0
  %1602 = vmatpush1.msra.mxu0 0.0
  %1603 = vmatprep.subr.mxu0 0.0
  %1604 = vmatpush1.msra.mxu0 0.0
  %1605 = vmatprep.subr.mxu0 0.0
  %1606 = vmatpush1.msra.mxu0 %v1559
  %1607 = vmatprep.subr.mxu0 0.0
  %1608 = vmatpush1.msra.mxu0 %v1558
  %1609 = vmatprep.subr.mxu0 0.0
  %1610 = vmatpush1.msra.mxu0 %v1557
  %1611 = vmatprep.subr.mxu0 0.0
  %1612 = vmatpush1.msra.mxu0 %v1556
  %1613 = vmatprep.subr.mxu0 0.0
  %1614 = vmatpush1.msra.mxu0 %v1555
  %1615 = vmatprep.subr.mxu0 0.0
  %1616 = vmatpush1.msra.mxu0 %v1554
  %1617 = vmatprep.subr.mxu0 0.0
  %1618 = vmatpush1.msra.mxu0 %v1553
  %1619 = vmatprep.subr.mxu0 0.0
  %1620 = vmatpush1.msra.mxu0 %v1552
  %1621 = vmatprep.subr.mxu0 0.0
  %1622 = vmatpush2.msra.mxu0 0.0
  %1623 = vmatprep.subr.mxu0 0.0
  %1624 = vmatpush2.msra.mxu0 0.0
  %1625 = vmatprep.subr.mxu0 0.0
  %1626 = vmatpush2.msra.mxu0 0.0
  %1627 = vmatprep.subr.mxu0 0.0
  %1628 = vmatpush2.msra.mxu0 0.0
  %1629 = vmatprep.subr.mxu0 0.0
  %1630 = vmatpush2.msra.mxu0 0.0
  %1631 = vmatprep.subr.mxu0 0.0
  %1632 = vmatpush2.msra.mxu0 0.0
  %1633 = vmatprep.subr.mxu0 0.0
  %1634 = vmatpush2.msra.mxu0 0.0
  %1635 = vmatprep.subr.mxu0 0.0
  %1636 = vmatpush2.msra.mxu0 0.0
  %1637 = vmatprep.subr.mxu0 0.0
  %1638 = vmatpush2.msra.mxu0 0.0
  %1639 = vmatprep.subr.mxu0 0.0
  %1640 = vmatpush2.msra.mxu0 0.0
  %1641 = vmatprep.subr.mxu0 0.0
  %1642 = vmatpush2.msra.mxu0 0.0
  %1643 = vmatprep.subr.mxu0 0.0
  %1644 = vmatpush2.msra.mxu0 0.0
  %1645 = vmatprep.subr.mxu0 0.0
  %1646 = vmatpush2.msra.mxu0 0.0
  %1647 = vmatprep.subr.mxu0 0.0
  %1648 = vmatpush2.msra.mxu0 0.0
  %1649 = vmatprep.subr.mxu0 0.0
  %1650 = vmatpush2.msra.mxu0 0.0
  %1651 = vmatprep.subr.mxu0 0.0
  %1652 = vmatpush2.msra.mxu0 0.0
  %1653 = vmatprep.mubr.f32.mxu0 0.0
  %1654 = vmatmul.mubr.f32.gmra.mxu0 %v1578
  %v1655 = vpop.f32.mrf.mxu0
  %v1656 = vadd.f32 %v1562, %v1655
  %v1657 = vpop.f32.mrf.mxu0
  %1658 = vmatprep.mubr.f32.mxu0 0.0
  %1659 = vmatmul.mubr.f32.gmra.mxu0 %v1581
  %v1660 = vpop.f32.mrf.mxu0
  %v1661 = vadd.f32 %v1566, %v1660
  %v1662 = vpop.f32.mrf.mxu0
  %1663 = vmatprep.mubr.f32.mxu0 0.0
  %1664 = vmatmul.mubr.f32.gmra.mxu0 %v1584
  %v1665 = vpop.f32.mrf.mxu0
  %v1666 = vadd.f32 %v1570, %v1665
  %v1667 = vpop.f32.mrf.mxu0
  %1668 = vmatprep.mubr.f32.mxu0 0.0
  %1669 = vmatmul.mubr.f32.gmra.mxu0 %v1587
  %v1670 = vpop.f32.mrf.mxu0
  %v1671 = vadd.f32 %v1574, %v1670
  %v1672 = vpop.f32.mrf.mxu0
  %1673 = vdwg.mxu0
  %v1674 = vadd.f32 %v1115, %v1656
  %v1675 = vadd.f32 %v1116, %v1661
  %v1676 = vadd.f32 %v1117, %v1666
  %v1677 = vadd.f32 %v1118, %v1671
  %1678 = vst [vmem:[%s7] sm:$0xff] %v1674
  %1679 = vst [vmem:[%s7 + $0x8] sm:$0xff] %v1675
  %1680 = vst [vmem:[%s7 + $0x10] sm:$0xff] %v1676
  %1681 = vst [vmem:[%s7 + $0x18] sm:$0xff] %v1677
  // Predicated region
  $region30: #{token_decoder_forward.1} parent=0 // pred_check
    _
  $region31: #{token_decoder_forward.1} parent=0 // pred_check_branch
    %1683 = sbr.rel (0) target = $region33
  $region32: #{token_decoder_forward.1} parent=0 // pred_region
    _
  $region33: #{token_decoder_forward.1} parent=0 // pred_fallthru
    _
  // Predicated region
  $region34: #{token_decoder_forward.1} parent=0 // pred_check
    _
  $region35: #{token_decoder_forward.1} parent=0 // pred_check_branch
    %1685 = sbr.rel (0) target = $region37
  $region36: #{token_decoder_forward.1} parent=0 // pred_region
    _
  $region37: #{token_decoder_forward.1} parent=0 // pred_fallthru
    _

</llo_original>
